<compile_context>
chip_gen: v5e
topology: v5e:2x2
jax: 0.10.0
libtpu: 0.0.40
codegen_flags: <defaults>
</compile_context>

<pallas_src>
import math

import jax
import jax.numpy as jnp
from jax.experimental import pallas as pl
from jax.experimental.pallas import tpu as pltpu


# torch LSTM gate order is [i, f, g, o]; we fuse columns as [I | F | O | G] so the
# two sigmoid-only gates fill the first 128 lanes and [o|g] fills the second.
GATE_ORDER = (0, 1, 3, 2)


# ----------------------------------------------------------------------------
# Fused kernel: bi-LSTM recurrence (both directions) + self-attention.
# lstm_out never leaves VMEM; the only HBM output is the final (B, 2H).
# ----------------------------------------------------------------------------
def _word_to_sent_kernel(xp_ref, mw_ref, whh_ref, h0_ref, c0_ref,
                         wsent_ref, bsent_ref, proj_ref, out_ref,
                         hf_scr, hb_scr):
    S, B, G = xp_ref.shape          # G = 8H, gate blocks [I | F | O | G]
    D = G // 4                      # 2H (per-gate block width, [fwd | bwd])
    H = D // 2
    W = 2 * D                       # wide-state width = one full 128-lane row
    f32 = jnp.float32
    bf16 = jnp.bfloat16

    whh = whh_ref[...]              # (W, G) bf16; rows D: are zeros (junk half)
    # static lane mask, hoisted (JAX does not CSE broadcasts inside the loop)
    lo_half = jnp.broadcast_to(
        jax.lax.broadcasted_iota(jnp.int32, (1, W), 1) < D, (B, W))

    hw = jnp.broadcast_to(h0_ref[...], (B, W)).astype(f32)   # [h_f h_b | junk]
    cw = jnp.broadcast_to(c0_ref[...], (B, W)).astype(f32)   # [c_f c_b | c_f c_b]

    def step(k, carry):
        hw, cw = carry
        tb = S - 1 - k
        # one bf16 MXU push per step: (B, W) @ (W, G); junk half hits zero rows
        gates = xp_ref[k] + jnp.dot(hw.astype(bf16), whh,
                                    preferred_element_type=f32)       # (B, G)
        # vreg-aligned activations: [i|f] and [o|g] are whole 128-lane blocks
        act_if = jax.nn.sigmoid(gates[:, :W])                         # [ i | f ]
        blk_og = gates[:, W:]
        act_og = jnp.where(lo_half, jax.nn.sigmoid(blk_og),
                           jnp.tanh(blk_og))                          # [ o | g ]
        # wide-state cell update with no sub-vreg extraction (rolls are XLU):
        g_or_c = jnp.where(lo_half, pltpu.roll(act_og, shift=D, axis=1), cw)
        prod = act_if * g_or_c                                        # [i*g|f*c]
        c_new = prod + pltpu.roll(prod, shift=D, axis=1)              # [c' | c']
        h_new = act_og * jnp.tanh(c_new)                   # [o*tanh(c') | junk]
        m = mw_ref[k]                                      # (B, W) freeze mask
        h_out = m * h_new            # zero past seq end (pad_packed semantics)
        hf_scr[k] = h_out            # lanes [0:H] = forward output at time k
        hb_scr[tb] = h_out           # lanes [H:D] = backward output at time S-1-k
        # freeze state past sequence end (packed-sequence semantics)
        return hw + m * (h_new - hw), cw + m * (c_new - cw)

    jax.lax.fori_loop(0, S, step, (hw, cw), unroll=True)

    # --- batched self-attention epilogue: one matmul + vectorized softmax ----
    hf = hf_scr[...][:, :, :D]                         # (S, B, D)
    hb = hb_scr[...][:, :, :D]
    lane_d = jax.lax.broadcasted_iota(jnp.int32, (1, 1, D), 2)
    hcat = jnp.where(lane_d < H, hf, hb)               # lstm_out, time-major

    so = jnp.tanh(jnp.dot(hcat.reshape(S * B, D).astype(bf16), wsent_ref[...],
                          preferred_element_type=f32) + bsent_ref[...])
    attn = jnp.sum(so.reshape(S, B, D) * proj_ref[...], axis=-1,
                   keepdims=True) + 1e-8               # (S, B, 1)
    # F.softmax with no dim on a 3-D tensor reduces over dim 0 = the batch axis
    e = jnp.exp(attn - jnp.max(attn, axis=1, keepdims=True))
    den = jnp.sum(e, axis=1, keepdims=True)
    norm = e * pl.reciprocal(den, approx=False) + 1e-8
    out_ref[...] = jnp.sum(norm * hcat, axis=0).astype(out_ref.dtype)


# ----------------------------------------------------------------------------
# JAX glue: embedding gather, hoisted input projection, weight fusion, masks.
# ----------------------------------------------------------------------------
def _fuse_dirs(w_f, w_b, h):
    """Fuse per-direction weights into column order
    [i_f, i_b, f_f, f_b, o_f, o_b, g_f, g_b]  (gate blocks [I | F | O | G])."""
    cols = []
    for q in GATE_ORDER:
        cols.append(w_f[..., q * h:(q + 1) * h])
        cols.append(w_b[..., q * h:(q + 1) * h])
    return jnp.concatenate(cols, axis=-1)


def word_to_sent_forward(tokens, sent_lens, params):
    B, S = tokens.shape
    H = params["init_h"].shape[-1]
    E = params["embedding"].shape[-1]
    D = 2 * H
    W = 2 * D
    G = 8 * H
    f32 = jnp.float32
    bf16 = jnp.bfloat16

    # fused weights; W_hh is block-structured so one (B,W)x(W,G) matmul computes
    # both directions' recurrent gates (zero rows for the wide-state junk half).
    wih_gm = _fuse_dirs(params["wih_f"], params["wih_b"], H)           # (E, 8H)
    b_gm = _fuse_dirs(params["b_f"], params["b_b"], H)                 # (1, 8H)
    zeros_h = jnp.zeros((H, 4 * H), f32)
    whh_gm = _fuse_dirs(
        jnp.concatenate([params["whh_f"], zeros_h], axis=0),
        jnp.concatenate([zeros_h, params["whh_b"]], axis=0), H)        # (2H, 8H)
    whh_wide = jnp.concatenate(
        [whh_gm, jnp.zeros((D, G), f32)], axis=0).astype(bf16)         # (W, 8H)

    # embedding lookup (time-major) + hoisted input projection (one matmul,
    # fully parallel over S*B; the kernel's serial loop only does h @ W_hh).
    emb_tm = params["embedding"][tokens.T]                             # (S, B, E)
    xproj = (jnp.dot(emb_tm.reshape(S * B, E), wih_gm,
                     preferred_element_type=f32) + b_gm).reshape(S, B, G)

    # pre-reverse the backward-direction gate columns: xp_comb[k] holds the
    # forward columns at time k and the backward columns at time S-1-k.
    col = jnp.arange(G, dtype=jnp.int32)
    fwd_cols = (col % D) < H
    xp_comb = jnp.where(fwd_cols[None, None, :], xproj, xproj[::-1])

    # combined freeze/output mask, pre-widened to the wide-state lane layout:
    # lanes [0:H]=mask(k), [H:D]=mask(S-1-k), repeated for lanes [D:2D].
    t_idx = jnp.arange(S, dtype=jnp.int32)[:, None]
    valid = (t_idx < sent_lens[None, :]).astype(f32)                   # (S, B)
    lane_w = jnp.arange(W, dtype=jnp.int32)
    m_wide = jnp.where((lane_w % D < H)[None, None, :],
                       valid[:, :, None], valid[::-1][:, :, None])     # (S, B, W)

    h0 = jnp.concatenate([params["init_h"][0], params["init_h"][1]])   # (D,)
    c0 = jnp.concatenate([params["init_c"][0], params["init_c"][1]])
    h0w = jnp.concatenate([h0, h0])[None, :]                           # (1, W)
    c0w = jnp.concatenate([c0, c0])[None, :]                           # (1, W) = [c|c]

    wsent = params["W_sent"].astype(bf16)                              # (D, D)
    bsent = params["bias_sent"].reshape(1, D)
    projT = params["proj_sent"].reshape(1, D)

    vmem = pl.BlockSpec(memory_space=pltpu.MemorySpace.VMEM)
    return pl.pallas_call(
        _word_to_sent_kernel,
        out_shape=jax.ShapeDtypeStruct((B, D), jnp.float32),
        in_specs=[vmem] * 8,
        out_specs=vmem,
        scratch_shapes=[pltpu.VMEM((S, B, W), jnp.float32),   # fwd-indexed outputs
                        pltpu.VMEM((S, B, W), jnp.float32)],  # bwd-indexed outputs
    )(xp_comb, m_wide, whh_wide, h0w, c0w, wsent, bsent, projT)


if __name__ == "__main__":
    # small shapes: batch=4, seq=8, emb_dim=16, n_hidden=32, vocab=50,
    # n_layer=1, bidirectional=True, self_attn=True
    B, S, E, H, V = 4, 8, 16, 32, 50
    D = 2 * H

    key = jax.random.PRNGKey(0)
    ks = jax.random.split(key, 16)

    def u(k, shape, lim):
        return jax.random.uniform(k, shape, jnp.float32, -lim, lim)

    stdv = 1.0 / math.sqrt(H)
    params = {
        # nn.Embedding(V, E, padding_idx=0): N(0,1) init, row 0 zeroed
        "embedding": jax.random.normal(ks[0], (V, E), jnp.float32).at[0].set(0.0),
        "init_h": u(ks[1], (2, H), 0.01),                  # INIT = 0.01
        "init_c": u(ks[2], (2, H), 0.01),
        # forward-direction LSTM weights (stored transposed: (in, 4H), gates i,f,g,o)
        "wih_f": u(ks[3], (E, 4 * H), stdv),
        "whh_f": u(ks[4], (H, 4 * H), stdv),
        "b_f": u(ks[5], (1, 4 * H), stdv) + u(ks[6], (1, 4 * H), stdv),
        # backward-direction LSTM weights
        "wih_b": u(ks[7], (E, 4 * H), stdv),
        "whh_b": u(ks[8], (H, 4 * H), stdv),
        "b_b": u(ks[9], (1, 4 * H), stdv) + u(ks[10], (1, 4 * H), stdv),
        # self-attention params
        "W_sent": u(ks[11], (D, D), 0.1),
        # TODO(synk): bias_sent is never initialized in the torch module
        # (uninitialized memory); we use a deterministic uniform init instead.
        "bias_sent": u(ks[12], (D,), 0.1),
        "proj_sent": u(ks[13], (D, 1), 0.1),
    }

    sent_lens = jnp.asarray([8, 5, 7, 3], dtype=jnp.int32)
    tokens = jax.random.randint(ks[14], (B, S), 1, V)
    pad_mask = jnp.arange(S)[None, :] < sent_lens[:, None]
    tokens = jnp.where(pad_mask, tokens, 0)                # pad token id = 0

    fwd = jax.jit(word_to_sent_forward)
    out = fwd(tokens, sent_lens, params)
    jax.block_until_ready(out)
    assert out.shape == (B, D) and out.dtype == jnp.float32
    print("KERNEL_OK")
</pallas_src>

<mosaic_0001>
module attributes {stable_mosaic.version = 11 : i64} {
  func.func @_word_to_sent_kernel(%arg0: memref<8x4x256xf32, #tpu.memory_space<vmem>>, %arg1: memref<8x4x128xf32, #tpu.memory_space<vmem>>, %arg2: memref<128x256xbf16, #tpu.memory_space<vmem>>, %arg3: memref<1x128xf32, #tpu.memory_space<vmem>>, %arg4: memref<1x128xf32, #tpu.memory_space<vmem>>, %arg5: memref<64x64xbf16, #tpu.memory_space<vmem>>, %arg6: memref<1x64xf32, #tpu.memory_space<vmem>>, %arg7: memref<1x64xf32, #tpu.memory_space<vmem>>, %arg8: memref<4x64xf32, #tpu.memory_space<vmem>>, %arg9: memref<8x4x128xf32, #tpu.memory_space<vmem>>, %arg10: memref<8x4x128xf32, #tpu.memory_space<vmem>>) attributes {dimension_semantics = [], scalar_prefetch = 0 : i64, scratch_operands = 2 : i64, tpu.core_type = #tpu.core_type<tc>} {
    %c0 = arith.constant 0 : index
    %c0_0 = arith.constant 0 : index
    %0 = vector.load %arg2[%c0, %c0_0] : memref<128x256xbf16, #tpu.memory_space<vmem>>, vector<128x256xbf16>
    %1 = tpu.iota {dimensions = array<i32: 1>} : vector<1x128xi32>
    %c64_i32 = arith.constant 64 : i32
    %2 = vector.broadcast %c64_i32 : i32 to vector<1x128xi32>
    %3 = arith.cmpi slt, %1, %2 : vector<1x128xi32>
    %4 = vector.shape_cast %3 : vector<1x128xi1> to vector<1x128xi1>
    %5 = vector.broadcast %4 : vector<1x128xi1> to vector<4x128xi1>
    %c0_1 = arith.constant 0 : index
    %c0_2 = arith.constant 0 : index
    %6 = vector.load %arg3[%c0_1, %c0_2] : memref<1x128xf32, #tpu.memory_space<vmem>>, vector<1x128xf32>
    %7 = vector.shape_cast %6 : vector<1x128xf32> to vector<1x128xf32>
    %8 = vector.broadcast %7 : vector<1x128xf32> to vector<4x128xf32>
    %c0_3 = arith.constant 0 : index
    %c0_4 = arith.constant 0 : index
    %9 = vector.load %arg4[%c0_3, %c0_4] : memref<1x128xf32, #tpu.memory_space<vmem>>, vector<1x128xf32>
    %10 = vector.shape_cast %9 : vector<1x128xf32> to vector<1x128xf32>
    %11 = vector.broadcast %10 : vector<1x128xf32> to vector<4x128xf32>
    %c0_i32 = arith.constant 0 : i32
    %c7_i32 = arith.constant 7 : i32
    %12 = arith.subi %c7_i32, %c0_i32 : i32
    %13 = arith.index_cast %c0_i32 : i32 to index
    %c0_5 = arith.constant 0 : index
    %c0_6 = arith.constant 0 : index
    %14 = vector.load %arg0[%13, %c0_5, %c0_6] : memref<8x4x256xf32, #tpu.memory_space<vmem>>, vector<1x4x256xf32>
    %15 = vector.shape_cast %14 : vector<1x4x256xf32> to vector<4x256xf32>
    %16 = arith.truncf %8 : vector<4x128xf32> to vector<4x128xbf16>
    %cst = arith.constant dense<0.000000e+00> : vector<4x256xf32>
    %17 = tpu.matmul %16, %0, %cst {dimension_numbers = #tpu.dot_dimension_numbers<[1], [0], [0], [1], [0, 0, 1, 1], [], []>} : vector<4x128xbf16>, vector<128x256xbf16>, vector<4x256xf32> -> vector<4x256xf32>
    %18 = arith.addf %15, %17 : vector<4x256xf32>
    %19 = vector.extract_strided_slice %18 {offsets = [0, 0], sizes = [4, 128], strides = [1, 1]} : vector<4x256xf32> to vector<4x128xf32>
    %20 = arith.negf %19 : vector<4x128xf32>
    %21 = math.exp %20 : vector<4x128xf32>
    %cst_7 = arith.constant 1.000000e+00 : f32
    %22 = vector.broadcast %cst_7 : f32 to vector<4x128xf32>
    %23 = arith.addf %22, %21 : vector<4x128xf32>
    %24 = arith.divf %22, %23 : vector<4x128xf32>
    %25 = vector.extract_strided_slice %18 {offsets = [0, 128], sizes = [4, 128], strides = [1, 1]} : vector<4x256xf32> to vector<4x128xf32>
    %26 = arith.negf %25 : vector<4x128xf32>
    %27 = math.exp %26 : vector<4x128xf32>
    %cst_8 = arith.constant 1.000000e+00 : f32
    %28 = vector.broadcast %cst_8 : f32 to vector<4x128xf32>
    %29 = arith.addf %28, %27 : vector<4x128xf32>
    %30 = arith.divf %28, %29 : vector<4x128xf32>
    %31 = math.tanh %25 : vector<4x128xf32>
    %32 = arith.select %5, %30, %31 : vector<4x128xi1>, vector<4x128xf32>
    %c64_i32_9 = arith.constant 64 : i32
    %33 = tpu.dynamic_rotate %32 by %c64_i32_9 dim 1 : vector<4x128xf32>, i32 -> vector<4x128xf32>
    %34 = arith.select %5, %33, %11 : vector<4x128xi1>, vector<4x128xf32>
    %35 = arith.mulf %24, %34 : vector<4x128xf32>
    %c64_i32_10 = arith.constant 64 : i32
    %36 = tpu.dynamic_rotate %35 by %c64_i32_10 dim 1 : vector<4x128xf32>, i32 -> vector<4x128xf32>
    %37 = arith.addf %35, %36 : vector<4x128xf32>
    %38 = math.tanh %37 : vector<4x128xf32>
    %39 = arith.mulf %32, %38 : vector<4x128xf32>
    %40 = arith.index_cast %c0_i32 : i32 to index
    %c0_11 = arith.constant 0 : index
    %c0_12 = arith.constant 0 : index
    %41 = vector.load %arg1[%40, %c0_11, %c0_12] : memref<8x4x128xf32, #tpu.memory_space<vmem>>, vector<1x4x128xf32>
    %42 = vector.shape_cast %41 : vector<1x4x128xf32> to vector<4x128xf32>
    %43 = arith.mulf %42, %39 : vector<4x128xf32>
    %44 = arith.index_cast %c0_i32 : i32 to index
    %c0_13 = arith.constant 0 : index
    %c0_14 = arith.constant 0 : index
    %45 = vector.load %arg9[%44, %c0_13, %c0_14] : memref<8x4x128xf32, #tpu.memory_space<vmem>>, vector<1x4x128xf32>
    %46 = vector.shape_cast %45 : vector<1x4x128xf32> to vector<4x128xf32>
    %47 = vector.shape_cast %43 : vector<4x128xf32> to vector<1x4x128xf32>
    tpu.vector_store %arg9[%44, %c0_13, %c0_14], %47 {strides = array<i32>} : memref<8x4x128xf32, #tpu.memory_space<vmem>>, vector<1x4x128xf32>,
    %48 = arith.index_cast %12 : i32 to index
    %c0_15 = arith.constant 0 : index
    %c0_16 = arith.constant 0 : index
    %49 = vector.load %arg10[%48, %c0_15, %c0_16] : memref<8x4x128xf32, #tpu.memory_space<vmem>>, vector<1x4x128xf32>
    %50 = vector.shape_cast %49 : vector<1x4x128xf32> to vector<4x128xf32>
    %51 = vector.shape_cast %43 : vector<4x128xf32> to vector<1x4x128xf32>
    tpu.vector_store %arg10[%48, %c0_15, %c0_16], %51 {strides = array<i32>} : memref<8x4x128xf32, #tpu.memory_space<vmem>>, vector<1x4x128xf32>,
    %52 = arith.subf %39, %8 : vector<4x128xf32>
    %53 = arith.mulf %42, %52 : vector<4x128xf32>
    %54 = arith.addf %8, %53 : vector<4x128xf32>
    %55 = arith.subf %37, %11 : vector<4x128xf32>
    %56 = arith.mulf %42, %55 : vector<4x128xf32>
    %57 = arith.addf %11, %56 : vector<4x128xf32>
    %c1_i32 = arith.constant 1 : i32
    %c7_i32_17 = arith.constant 7 : i32
    %58 = arith.subi %c7_i32_17, %c1_i32 : i32
    %59 = arith.index_cast %c1_i32 : i32 to index
    %c0_18 = arith.constant 0 : index
    %c0_19 = arith.constant 0 : index
    %60 = vector.load %arg0[%59, %c0_18, %c0_19] : memref<8x4x256xf32, #tpu.memory_space<vmem>>, vector<1x4x256xf32>
    %61 = vector.shape_cast %60 : vector<1x4x256xf32> to vector<4x256xf32>
    %62 = arith.truncf %54 : vector<4x128xf32> to vector<4x128xbf16>
    %cst_20 = arith.constant dense<0.000000e+00> : vector<4x256xf32>
    %63 = tpu.matmul %62, %0, %cst_20 {dimension_numbers = #tpu.dot_dimension_numbers<[1], [0], [0], [1], [0, 0, 1, 1], [], []>} : vector<4x128xbf16>, vector<128x256xbf16>, vector<4x256xf32> -> vector<4x256xf32>
    %64 = arith.addf %61, %63 : vector<4x256xf32>
    %65 = vector.extract_strided_slice %64 {offsets = [0, 0], sizes = [4, 128], strides = [1, 1]} : vector<4x256xf32> to vector<4x128xf32>
    %66 = arith.negf %65 : vector<4x128xf32>
    %67 = math.exp %66 : vector<4x128xf32>
    %cst_21 = arith.constant 1.000000e+00 : f32
    %68 = vector.broadcast %cst_21 : f32 to vector<4x128xf32>
    %69 = arith.addf %68, %67 : vector<4x128xf32>
    %70 = arith.divf %68, %69 : vector<4x128xf32>
    %71 = vector.extract_strided_slice %64 {offsets = [0, 128], sizes = [4, 128], strides = [1, 1]} : vector<4x256xf32> to vector<4x128xf32>
    %72 = arith.negf %71 : vector<4x128xf32>
    %73 = math.exp %72 : vector<4x128xf32>
    %cst_22 = arith.constant 1.000000e+00 : f32
    %74 = vector.broadcast %cst_22 : f32 to vector<4x128xf32>
    %75 = arith.addf %74, %73 : vector<4x128xf32>
    %76 = arith.divf %74, %75 : vector<4x128xf32>
    %77 = math.tanh %71 : vector<4x128xf32>
    %78 = arith.select %5, %76, %77 : vector<4x128xi1>, vector<4x128xf32>
    %c64_i32_23 = arith.constant 64 : i32
    %79 = tpu.dynamic_rotate %78 by %c64_i32_23 dim 1 : vector<4x128xf32>, i32 -> vector<4x128xf32>
    %80 = arith.select %5, %79, %57 : vector<4x128xi1>, vector<4x128xf32>
    %81 = arith.mulf %70, %80 : vector<4x128xf32>
    %c64_i32_24 = arith.constant 64 : i32
    %82 = tpu.dynamic_rotate %81 by %c64_i32_24 dim 1 : vector<4x128xf32>, i32 -> vector<4x128xf32>
    %83 = arith.addf %81, %82 : vector<4x128xf32>
    %84 = math.tanh %83 : vector<4x128xf32>
    %85 = arith.mulf %78, %84 : vector<4x128xf32>
    %86 = arith.index_cast %c1_i32 : i32 to index
    %c0_25 = arith.constant 0 : index
    %c0_26 = arith.constant 0 : index
    %87 = vector.load %arg1[%86, %c0_25, %c0_26] : memref<8x4x128xf32, #tpu.memory_space<vmem>>, vector<1x4x128xf32>
    %88 = vector.shape_cast %87 : vector<1x4x128xf32> to vector<4x128xf32>
    %89 = arith.mulf %88, %85 : vector<4x128xf32>
    %90 = arith.index_cast %c1_i32 : i32 to index
    %c0_27 = arith.constant 0 : index
    %c0_28 = arith.constant 0 : index
    %91 = vector.load %arg9[%90, %c0_27, %c0_28] : memref<8x4x128xf32, #tpu.memory_space<vmem>>, vector<1x4x128xf32>
    %92 = vector.shape_cast %91 : vector<1x4x128xf32> to vector<4x128xf32>
    %93 = vector.shape_cast %89 : vector<4x128xf32> to vector<1x4x128xf32>
    tpu.vector_store %arg9[%90, %c0_27, %c0_28], %93 {strides = array<i32>} : memref<8x4x128xf32, #tpu.memory_space<vmem>>, vector<1x4x128xf32>,
    %94 = arith.index_cast %58 : i32 to index
    %c0_29 = arith.constant 0 : index
    %c0_30 = arith.constant 0 : index
    %95 = vector.load %arg10[%94, %c0_29, %c0_30] : memref<8x4x128xf32, #tpu.memory_space<vmem>>, vector<1x4x128xf32>
    %96 = vector.shape_cast %95 : vector<1x4x128xf32> to vector<4x128xf32>
    %97 = vector.shape_cast %89 : vector<4x128xf32> to vector<1x4x128xf32>
    tpu.vector_store %arg10[%94, %c0_29, %c0_30], %97 {strides = array<i32>} : memref<8x4x128xf32, #tpu.memory_space<vmem>>, vector<1x4x128xf32>,
    %98 = arith.subf %85, %54 : vector<4x128xf32>
    %99 = arith.mulf %88, %98 : vector<4x128xf32>
    %100 = arith.addf %54, %99 : vector<4x128xf32>
    %101 = arith.subf %83, %57 : vector<4x128xf32>
    %102 = arith.mulf %88, %101 : vector<4x128xf32>
    %103 = arith.addf %57, %102 : vector<4x128xf32>
    %c2_i32 = arith.constant 2 : i32
    %c7_i32_31 = arith.constant 7 : i32
    %104 = arith.subi %c7_i32_31, %c2_i32 : i32
    %105 = arith.index_cast %c2_i32 : i32 to index
    %c0_32 = arith.constant 0 : index
    %c0_33 = arith.constant 0 : index
    %106 = vector.load %arg0[%105, %c0_32, %c0_33] : memref<8x4x256xf32, #tpu.memory_space<vmem>>, vector<1x4x256xf32>
    %107 = vector.shape_cast %106 : vector<1x4x256xf32> to vector<4x256xf32>
    %108 = arith.truncf %100 : vector<4x128xf32> to vector<4x128xbf16>
    %cst_34 = arith.constant dense<0.000000e+00> : vector<4x256xf32>
    %109 = tpu.matmul %108, %0, %cst_34 {dimension_numbers = #tpu.dot_dimension_numbers<[1], [0], [0], [1], [0, 0, 1, 1], [], []>} : vector<4x128xbf16>, vector<128x256xbf16>, vector<4x256xf32> -> vector<4x256xf32>
    %110 = arith.addf %107, %109 : vector<4x256xf32>
    %111 = vector.extract_strided_slice %110 {offsets = [0, 0], sizes = [4, 128], strides = [1, 1]} : vector<4x256xf32> to vector<4x128xf32>
    %112 = arith.negf %111 : vector<4x128xf32>
    %113 = math.exp %112 : vector<4x128xf32>
    %cst_35 = arith.constant 1.000000e+00 : f32
    %114 = vector.broadcast %cst_35 : f32 to vector<4x128xf32>
    %115 = arith.addf %114, %113 : vector<4x128xf32>
    %116 = arith.divf %114, %115 : vector<4x128xf32>
    %117 = vector.extract_strided_slice %110 {offsets = [0, 128], sizes = [4, 128], strides = [1, 1]} : vector<4x256xf32> to vector<4x128xf32>
    %118 = arith.negf %117 : vector<4x128xf32>
    %119 = math.exp %118 : vector<4x128xf32>
    %cst_36 = arith.constant 1.000000e+00 : f32
    %120 = vector.broadcast %cst_36 : f32 to vector<4x128xf32>
    %121 = arith.addf %120, %119 : vector<4x128xf32>
    %122 = arith.divf %120, %121 : vector<4x128xf32>
    %123 = math.tanh %117 : vector<4x128xf32>
    %124 = arith.select %5, %122, %123 : vector<4x128xi1>, vector<4x128xf32>
    %c64_i32_37 = arith.constant 64 : i32
    %125 = tpu.dynamic_rotate %124 by %c64_i32_37 dim 1 : vector<4x128xf32>, i32 -> vector<4x128xf32>
    %126 = arith.select %5, %125, %103 : vector<4x128xi1>, vector<4x128xf32>
    %127 = arith.mulf %116, %126 : vector<4x128xf32>
    %c64_i32_38 = arith.constant 64 : i32
    %128 = tpu.dynamic_rotate %127 by %c64_i32_38 dim 1 : vector<4x128xf32>, i32 -> vector<4x128xf32>
    %129 = arith.addf %127, %128 : vector<4x128xf32>
    %130 = math.tanh %129 : vector<4x128xf32>
    %131 = arith.mulf %124, %130 : vector<4x128xf32>
    %132 = arith.index_cast %c2_i32 : i32 to index
    %c0_39 = arith.constant 0 : index
    %c0_40 = arith.constant 0 : index
    %133 = vector.load %arg1[%132, %c0_39, %c0_40] : memref<8x4x128xf32, #tpu.memory_space<vmem>>, vector<1x4x128xf32>
    %134 = vector.shape_cast %133 : vector<1x4x128xf32> to vector<4x128xf32>
    %135 = arith.mulf %134, %131 : vector<4x128xf32>
    %136 = arith.index_cast %c2_i32 : i32 to index
    %c0_41 = arith.constant 0 : index
    %c0_42 = arith.constant 0 : index
    %137 = vector.load %arg9[%136, %c0_41, %c0_42] : memref<8x4x128xf32, #tpu.memory_space<vmem>>, vector<1x4x128xf32>
    %138 = vector.shape_cast %137 : vector<1x4x128xf32> to vector<4x128xf32>
    %139 = vector.shape_cast %135 : vector<4x128xf32> to vector<1x4x128xf32>
    tpu.vector_store %arg9[%136, %c0_41, %c0_42], %139 {strides = array<i32>} : memref<8x4x128xf32, #tpu.memory_space<vmem>>, vector<1x4x128xf32>,
    %140 = arith.index_cast %104 : i32 to index
    %c0_43 = arith.constant 0 : index
    %c0_44 = arith.constant 0 : index
    %141 = vector.load %arg10[%140, %c0_43, %c0_44] : memref<8x4x128xf32, #tpu.memory_space<vmem>>, vector<1x4x128xf32>
    %142 = vector.shape_cast %141 : vector<1x4x128xf32> to vector<4x128xf32>
    %143 = vector.shape_cast %135 : vector<4x128xf32> to vector<1x4x128xf32>
    tpu.vector_store %arg10[%140, %c0_43, %c0_44], %143 {strides = array<i32>} : memref<8x4x128xf32, #tpu.memory_space<vmem>>, vector<1x4x128xf32>,
    %144 = arith.subf %131, %100 : vector<4x128xf32>
    %145 = arith.mulf %134, %144 : vector<4x128xf32>
    %146 = arith.addf %100, %145 : vector<4x128xf32>
    %147 = arith.subf %129, %103 : vector<4x128xf32>
    %148 = arith.mulf %134, %147 : vector<4x128xf32>
    %149 = arith.addf %103, %148 : vector<4x128xf32>
    %c3_i32 = arith.constant 3 : i32
    %c7_i32_45 = arith.constant 7 : i32
    %150 = arith.subi %c7_i32_45, %c3_i32 : i32
    %151 = arith.index_cast %c3_i32 : i32 to index
    %c0_46 = arith.constant 0 : index
    %c0_47 = arith.constant 0 : index
    %152 = vector.load %arg0[%151, %c0_46, %c0_47] : memref<8x4x256xf32, #tpu.memory_space<vmem>>, vector<1x4x256xf32>
    %153 = vector.shape_cast %152 : vector<1x4x256xf32> to vector<4x256xf32>
    %154 = arith.truncf %146 : vector<4x128xf32> to vector<4x128xbf16>
    %cst_48 = arith.constant dense<0.000000e+00> : vector<4x256xf32>
    %155 = tpu.matmul %154, %0, %cst_48 {dimension_numbers = #tpu.dot_dimension_numbers<[1], [0], [0], [1], [0, 0, 1, 1], [], []>} : vector<4x128xbf16>, vector<128x256xbf16>, vector<4x256xf32> -> vector<4x256xf32>
    %156 = arith.addf %153, %155 : vector<4x256xf32>
    %157 = vector.extract_strided_slice %156 {offsets = [0, 0], sizes = [4, 128], strides = [1, 1]} : vector<4x256xf32> to vector<4x128xf32>
    %158 = arith.negf %157 : vector<4x128xf32>
    %159 = math.exp %158 : vector<4x128xf32>
    %cst_49 = arith.constant 1.000000e+00 : f32
    %160 = vector.broadcast %cst_49 : f32 to vector<4x128xf32>
    %161 = arith.addf %160, %159 : vector<4x128xf32>
    %162 = arith.divf %160, %161 : vector<4x128xf32>
    %163 = vector.extract_strided_slice %156 {offsets = [0, 128], sizes = [4, 128], strides = [1, 1]} : vector<4x256xf32> to vector<4x128xf32>
    %164 = arith.negf %163 : vector<4x128xf32>
    %165 = math.exp %164 : vector<4x128xf32>
    %cst_50 = arith.constant 1.000000e+00 : f32
    %166 = vector.broadcast %cst_50 : f32 to vector<4x128xf32>
    %167 = arith.addf %166, %165 : vector<4x128xf32>
    %168 = arith.divf %166, %167 : vector<4x128xf32>
    %169 = math.tanh %163 : vector<4x128xf32>
    %170 = arith.select %5, %168, %169 : vector<4x128xi1>, vector<4x128xf32>
    %c64_i32_51 = arith.constant 64 : i32
    %171 = tpu.dynamic_rotate %170 by %c64_i32_51 dim 1 : vector<4x128xf32>, i32 -> vector<4x128xf32>
    %172 = arith.select %5, %171, %149 : vector<4x128xi1>, vector<4x128xf32>
    %173 = arith.mulf %162, %172 : vector<4x128xf32>
    %c64_i32_52 = arith.constant 64 : i32
    %174 = tpu.dynamic_rotate %173 by %c64_i32_52 dim 1 : vector<4x128xf32>, i32 -> vector<4x128xf32>
    %175 = arith.addf %173, %174 : vector<4x128xf32>
    %176 = math.tanh %175 : vector<4x128xf32>
    %177 = arith.mulf %170, %176 : vector<4x128xf32>
    %178 = arith.index_cast %c3_i32 : i32 to index
    %c0_53 = arith.constant 0 : index
    %c0_54 = arith.constant 0 : index
    %179 = vector.load %arg1[%178, %c0_53, %c0_54] : memref<8x4x128xf32, #tpu.memory_space<vmem>>, vector<1x4x128xf32>
    %180 = vector.shape_cast %179 : vector<1x4x128xf32> to vector<4x128xf32>
    %181 = arith.mulf %180, %177 : vector<4x128xf32>
    %182 = arith.index_cast %c3_i32 : i32 to index
    %c0_55 = arith.constant 0 : index
    %c0_56 = arith.constant 0 : index
    %183 = vector.load %arg9[%182, %c0_55, %c0_56] : memref<8x4x128xf32, #tpu.memory_space<vmem>>, vector<1x4x128xf32>
    %184 = vector.shape_cast %183 : vector<1x4x128xf32> to vector<4x128xf32>
    %185 = vector.shape_cast %181 : vector<4x128xf32> to vector<1x4x128xf32>
    tpu.vector_store %arg9[%182, %c0_55, %c0_56], %185 {strides = array<i32>} : memref<8x4x128xf32, #tpu.memory_space<vmem>>, vector<1x4x128xf32>,
    %186 = arith.index_cast %150 : i32 to index
    %c0_57 = arith.constant 0 : index
    %c0_58 = arith.constant 0 : index
    %187 = vector.load %arg10[%186, %c0_57, %c0_58] : memref<8x4x128xf32, #tpu.memory_space<vmem>>, vector<1x4x128xf32>
    %188 = vector.shape_cast %187 : vector<1x4x128xf32> to vector<4x128xf32>
    %189 = vector.shape_cast %181 : vector<4x128xf32> to vector<1x4x128xf32>
    tpu.vector_store %arg10[%186, %c0_57, %c0_58], %189 {strides = array<i32>} : memref<8x4x128xf32, #tpu.memory_space<vmem>>, vector<1x4x128xf32>,
    %190 = arith.subf %177, %146 : vector<4x128xf32>
    %191 = arith.mulf %180, %190 : vector<4x128xf32>
    %192 = arith.addf %146, %191 : vector<4x128xf32>
    %193 = arith.subf %175, %149 : vector<4x128xf32>
    %194 = arith.mulf %180, %193 : vector<4x128xf32>
    %195 = arith.addf %149, %194 : vector<4x128xf32>
    %c4_i32 = arith.constant 4 : i32
    %c7_i32_59 = arith.constant 7 : i32
    %196 = arith.subi %c7_i32_59, %c4_i32 : i32
    %197 = arith.index_cast %c4_i32 : i32 to index
    %c0_60 = arith.constant 0 : index
    %c0_61 = arith.constant 0 : index
    %198 = vector.load %arg0[%197, %c0_60, %c0_61] : memref<8x4x256xf32, #tpu.memory_space<vmem>>, vector<1x4x256xf32>
    %199 = vector.shape_cast %198 : vector<1x4x256xf32> to vector<4x256xf32>
    %200 = arith.truncf %192 : vector<4x128xf32> to vector<4x128xbf16>
    %cst_62 = arith.constant dense<0.000000e+00> : vector<4x256xf32>
    %201 = tpu.matmul %200, %0, %cst_62 {dimension_numbers = #tpu.dot_dimension_numbers<[1], [0], [0], [1], [0, 0, 1, 1], [], []>} : vector<4x128xbf16>, vector<128x256xbf16>, vector<4x256xf32> -> vector<4x256xf32>
    %202 = arith.addf %199, %201 : vector<4x256xf32>
    %203 = vector.extract_strided_slice %202 {offsets = [0, 0], sizes = [4, 128], strides = [1, 1]} : vector<4x256xf32> to vector<4x128xf32>
    %204 = arith.negf %203 : vector<4x128xf32>
    %205 = math.exp %204 : vector<4x128xf32>
    %cst_63 = arith.constant 1.000000e+00 : f32
    %206 = vector.broadcast %cst_63 : f32 to vector<4x128xf32>
    %207 = arith.addf %206, %205 : vector<4x128xf32>
    %208 = arith.divf %206, %207 : vector<4x128xf32>
    %209 = vector.extract_strided_slice %202 {offsets = [0, 128], sizes = [4, 128], strides = [1, 1]} : vector<4x256xf32> to vector<4x128xf32>
    %210 = arith.negf %209 : vector<4x128xf32>
    %211 = math.exp %210 : vector<4x128xf32>
    %cst_64 = arith.constant 1.000000e+00 : f32
    %212 = vector.broadcast %cst_64 : f32 to vector<4x128xf32>
    %213 = arith.addf %212, %211 : vector<4x128xf32>
    %214 = arith.divf %212, %213 : vector<4x128xf32>
    %215 = math.tanh %209 : vector<4x128xf32>
    %216 = arith.select %5, %214, %215 : vector<4x128xi1>, vector<4x128xf32>
    %c64_i32_65 = arith.constant 64 : i32
    %217 = tpu.dynamic_rotate %216 by %c64_i32_65 dim 1 : vector<4x128xf32>, i32 -> vector<4x128xf32>
    %218 = arith.select %5, %217, %195 : vector<4x128xi1>, vector<4x128xf32>
    %219 = arith.mulf %208, %218 : vector<4x128xf32>
    %c64_i32_66 = arith.constant 64 : i32
    %220 = tpu.dynamic_rotate %219 by %c64_i32_66 dim 1 : vector<4x128xf32>, i32 -> vector<4x128xf32>
    %221 = arith.addf %219, %220 : vector<4x128xf32>
    %222 = math.tanh %221 : vector<4x128xf32>
    %223 = arith.mulf %216, %222 : vector<4x128xf32>
    %224 = arith.index_cast %c4_i32 : i32 to index
    %c0_67 = arith.constant 0 : index
    %c0_68 = arith.constant 0 : index
    %225 = vector.load %arg1[%224, %c0_67, %c0_68] : memref<8x4x128xf32, #tpu.memory_space<vmem>>, vector<1x4x128xf32>
    %226 = vector.shape_cast %225 : vector<1x4x128xf32> to vector<4x128xf32>
    %227 = arith.mulf %226, %223 : vector<4x128xf32>
    %228 = arith.index_cast %c4_i32 : i32 to index
    %c0_69 = arith.constant 0 : index
    %c0_70 = arith.constant 0 : index
    %229 = vector.load %arg9[%228, %c0_69, %c0_70] : memref<8x4x128xf32, #tpu.memory_space<vmem>>, vector<1x4x128xf32>
    %230 = vector.shape_cast %229 : vector<1x4x128xf32> to vector<4x128xf32>
    %231 = vector.shape_cast %227 : vector<4x128xf32> to vector<1x4x128xf32>
    tpu.vector_store %arg9[%228, %c0_69, %c0_70], %231 {strides = array<i32>} : memref<8x4x128xf32, #tpu.memory_space<vmem>>, vector<1x4x128xf32>,
    %232 = arith.index_cast %196 : i32 to index
    %c0_71 = arith.constant 0 : index
    %c0_72 = arith.constant 0 : index
    %233 = vector.load %arg10[%232, %c0_71, %c0_72] : memref<8x4x128xf32, #tpu.memory_space<vmem>>, vector<1x4x128xf32>
    %234 = vector.shape_cast %233 : vector<1x4x128xf32> to vector<4x128xf32>
    %235 = vector.shape_cast %227 : vector<4x128xf32> to vector<1x4x128xf32>
    tpu.vector_store %arg10[%232, %c0_71, %c0_72], %235 {strides = array<i32>} : memref<8x4x128xf32, #tpu.memory_space<vmem>>, vector<1x4x128xf32>,
    %236 = arith.subf %223, %192 : vector<4x128xf32>
    %237 = arith.mulf %226, %236 : vector<4x128xf32>
    %238 = arith.addf %192, %237 : vector<4x128xf32>
    %239 = arith.subf %221, %195 : vector<4x128xf32>
    %240 = arith.mulf %226, %239 : vector<4x128xf32>
    %241 = arith.addf %195, %240 : vector<4x128xf32>
    %c5_i32 = arith.constant 5 : i32
    %c7_i32_73 = arith.constant 7 : i32
    %242 = arith.subi %c7_i32_73, %c5_i32 : i32
    %243 = arith.index_cast %c5_i32 : i32 to index
    %c0_74 = arith.constant 0 : index
    %c0_75 = arith.constant 0 : index
    %244 = vector.load %arg0[%243, %c0_74, %c0_75] : memref<8x4x256xf32, #tpu.memory_space<vmem>>, vector<1x4x256xf32>
    %245 = vector.shape_cast %244 : vector<1x4x256xf32> to vector<4x256xf32>
    %246 = arith.truncf %238 : vector<4x128xf32> to vector<4x128xbf16>
    %cst_76 = arith.constant dense<0.000000e+00> : vector<4x256xf32>
    %247 = tpu.matmul %246, %0, %cst_76 {dimension_numbers = #tpu.dot_dimension_numbers<[1], [0], [0], [1], [0, 0, 1, 1], [], []>} : vector<4x128xbf16>, vector<128x256xbf16>, vector<4x256xf32> -> vector<4x256xf32>
    %248 = arith.addf %245, %247 : vector<4x256xf32>
    %249 = vector.extract_strided_slice %248 {offsets = [0, 0], sizes = [4, 128], strides = [1, 1]} : vector<4x256xf32> to vector<4x128xf32>
    %250 = arith.negf %249 : vector<4x128xf32>
    %251 = math.exp %250 : vector<4x128xf32>
    %cst_77 = arith.constant 1.000000e+00 : f32
    %252 = vector.broadcast %cst_77 : f32 to vector<4x128xf32>
    %253 = arith.addf %252, %251 : vector<4x128xf32>
    %254 = arith.divf %252, %253 : vector<4x128xf32>
    %255 = vector.extract_strided_slice %248 {offsets = [0, 128], sizes = [4, 128], strides = [1, 1]} : vector<4x256xf32> to vector<4x128xf32>
    %256 = arith.negf %255 : vector<4x128xf32>
    %257 = math.exp %256 : vector<4x128xf32>
    %cst_78 = arith.constant 1.000000e+00 : f32
    %258 = vector.broadcast %cst_78 : f32 to vector<4x128xf32>
    %259 = arith.addf %258, %257 : vector<4x128xf32>
    %260 = arith.divf %258, %259 : vector<4x128xf32>
    %261 = math.tanh %255 : vector<4x128xf32>
    %262 = arith.select %5, %260, %261 : vector<4x128xi1>, vector<4x128xf32>
    %c64_i32_79 = arith.constant 64 : i32
    %263 = tpu.dynamic_rotate %262 by %c64_i32_79 dim 1 : vector<4x128xf32>, i32 -> vector<4x128xf32>
    %264 = arith.select %5, %263, %241 : vector<4x128xi1>, vector<4x128xf32>
    %265 = arith.mulf %254, %264 : vector<4x128xf32>
    %c64_i32_80 = arith.constant 64 : i32
    %266 = tpu.dynamic_rotate %265 by %c64_i32_80 dim 1 : vector<4x128xf32>, i32 -> vector<4x128xf32>
    %267 = arith.addf %265, %266 : vector<4x128xf32>
    %268 = math.tanh %267 : vector<4x128xf32>
    %269 = arith.mulf %262, %268 : vector<4x128xf32>
    %270 = arith.index_cast %c5_i32 : i32 to index
    %c0_81 = arith.constant 0 : index
    %c0_82 = arith.constant 0 : index
    %271 = vector.load %arg1[%270, %c0_81, %c0_82] : memref<8x4x128xf32, #tpu.memory_space<vmem>>, vector<1x4x128xf32>
    %272 = vector.shape_cast %271 : vector<1x4x128xf32> to vector<4x128xf32>
    %273 = arith.mulf %272, %269 : vector<4x128xf32>
    %274 = arith.index_cast %c5_i32 : i32 to index
    %c0_83 = arith.constant 0 : index
    %c0_84 = arith.constant 0 : index
    %275 = vector.load %arg9[%274, %c0_83, %c0_84] : memref<8x4x128xf32, #tpu.memory_space<vmem>>, vector<1x4x128xf32>
    %276 = vector.shape_cast %275 : vector<1x4x128xf32> to vector<4x128xf32>
    %277 = vector.shape_cast %273 : vector<4x128xf32> to vector<1x4x128xf32>
    tpu.vector_store %arg9[%274, %c0_83, %c0_84], %277 {strides = array<i32>} : memref<8x4x128xf32, #tpu.memory_space<vmem>>, vector<1x4x128xf32>,
    %278 = arith.index_cast %242 : i32 to index
    %c0_85 = arith.constant 0 : index
    %c0_86 = arith.constant 0 : index
    %279 = vector.load %arg10[%278, %c0_85, %c0_86] : memref<8x4x128xf32, #tpu.memory_space<vmem>>, vector<1x4x128xf32>
    %280 = vector.shape_cast %279 : vector<1x4x128xf32> to vector<4x128xf32>
    %281 = vector.shape_cast %273 : vector<4x128xf32> to vector<1x4x128xf32>
    tpu.vector_store %arg10[%278, %c0_85, %c0_86], %281 {strides = array<i32>} : memref<8x4x128xf32, #tpu.memory_space<vmem>>, vector<1x4x128xf32>,
    %282 = arith.subf %269, %238 : vector<4x128xf32>
    %283 = arith.mulf %272, %282 : vector<4x128xf32>
    %284 = arith.addf %238, %283 : vector<4x128xf32>
    %285 = arith.subf %267, %241 : vector<4x128xf32>
    %286 = arith.mulf %272, %285 : vector<4x128xf32>
    %287 = arith.addf %241, %286 : vector<4x128xf32>
    %c6_i32 = arith.constant 6 : i32
    %c7_i32_87 = arith.constant 7 : i32
    %288 = arith.subi %c7_i32_87, %c6_i32 : i32
    %289 = arith.index_cast %c6_i32 : i32 to index
    %c0_88 = arith.constant 0 : index
    %c0_89 = arith.constant 0 : index
    %290 = vector.load %arg0[%289, %c0_88, %c0_89] : memref<8x4x256xf32, #tpu.memory_space<vmem>>, vector<1x4x256xf32>
    %291 = vector.shape_cast %290 : vector<1x4x256xf32> to vector<4x256xf32>
    %292 = arith.truncf %284 : vector<4x128xf32> to vector<4x128xbf16>
    %cst_90 = arith.constant dense<0.000000e+00> : vector<4x256xf32>
    %293 = tpu.matmul %292, %0, %cst_90 {dimension_numbers = #tpu.dot_dimension_numbers<[1], [0], [0], [1], [0, 0, 1, 1], [], []>} : vector<4x128xbf16>, vector<128x256xbf16>, vector<4x256xf32> -> vector<4x256xf32>
    %294 = arith.addf %291, %293 : vector<4x256xf32>
    %295 = vector.extract_strided_slice %294 {offsets = [0, 0], sizes = [4, 128], strides = [1, 1]} : vector<4x256xf32> to vector<4x128xf32>
    %296 = arith.negf %295 : vector<4x128xf32>
    %297 = math.exp %296 : vector<4x128xf32>
    %cst_91 = arith.constant 1.000000e+00 : f32
    %298 = vector.broadcast %cst_91 : f32 to vector<4x128xf32>
    %299 = arith.addf %298, %297 : vector<4x128xf32>
    %300 = arith.divf %298, %299 : vector<4x128xf32>
    %301 = vector.extract_strided_slice %294 {offsets = [0, 128], sizes = [4, 128], strides = [1, 1]} : vector<4x256xf32> to vector<4x128xf32>
    %302 = arith.negf %301 : vector<4x128xf32>
    %303 = math.exp %302 : vector<4x128xf32>
    %cst_92 = arith.constant 1.000000e+00 : f32
    %304 = vector.broadcast %cst_92 : f32 to vector<4x128xf32>
    %305 = arith.addf %304, %303 : vector<4x128xf32>
    %306 = arith.divf %304, %305 : vector<4x128xf32>
    %307 = math.tanh %301 : vector<4x128xf32>
    %308 = arith.select %5, %306, %307 : vector<4x128xi1>, vector<4x128xf32>
    %c64_i32_93 = arith.constant 64 : i32
    %309 = tpu.dynamic_rotate %308 by %c64_i32_93 dim 1 : vector<4x128xf32>, i32 -> vector<4x128xf32>
    %310 = arith.select %5, %309, %287 : vector<4x128xi1>, vector<4x128xf32>
    %311 = arith.mulf %300, %310 : vector<4x128xf32>
    %c64_i32_94 = arith.constant 64 : i32
    %312 = tpu.dynamic_rotate %311 by %c64_i32_94 dim 1 : vector<4x128xf32>, i32 -> vector<4x128xf32>
    %313 = arith.addf %311, %312 : vector<4x128xf32>
    %314 = math.tanh %313 : vector<4x128xf32>
    %315 = arith.mulf %308, %314 : vector<4x128xf32>
    %316 = arith.index_cast %c6_i32 : i32 to index
    %c0_95 = arith.constant 0 : index
    %c0_96 = arith.constant 0 : index
    %317 = vector.load %arg1[%316, %c0_95, %c0_96] : memref<8x4x128xf32, #tpu.memory_space<vmem>>, vector<1x4x128xf32>
    %318 = vector.shape_cast %317 : vector<1x4x128xf32> to vector<4x128xf32>
    %319 = arith.mulf %318, %315 : vector<4x128xf32>
    %320 = arith.index_cast %c6_i32 : i32 to index
    %c0_97 = arith.constant 0 : index
    %c0_98 = arith.constant 0 : index
    %321 = vector.load %arg9[%320, %c0_97, %c0_98] : memref<8x4x128xf32, #tpu.memory_space<vmem>>, vector<1x4x128xf32>
    %322 = vector.shape_cast %321 : vector<1x4x128xf32> to vector<4x128xf32>
    %323 = vector.shape_cast %319 : vector<4x128xf32> to vector<1x4x128xf32>
    tpu.vector_store %arg9[%320, %c0_97, %c0_98], %323 {strides = array<i32>} : memref<8x4x128xf32, #tpu.memory_space<vmem>>, vector<1x4x128xf32>,
    %324 = arith.index_cast %288 : i32 to index
    %c0_99 = arith.constant 0 : index
    %c0_100 = arith.constant 0 : index
    %325 = vector.load %arg10[%324, %c0_99, %c0_100] : memref<8x4x128xf32, #tpu.memory_space<vmem>>, vector<1x4x128xf32>
    %326 = vector.shape_cast %325 : vector<1x4x128xf32> to vector<4x128xf32>
    %327 = vector.shape_cast %319 : vector<4x128xf32> to vector<1x4x128xf32>
    tpu.vector_store %arg10[%324, %c0_99, %c0_100], %327 {strides = array<i32>} : memref<8x4x128xf32, #tpu.memory_space<vmem>>, vector<1x4x128xf32>,
    %328 = arith.subf %315, %284 : vector<4x128xf32>
    %329 = arith.mulf %318, %328 : vector<4x128xf32>
    %330 = arith.addf %284, %329 : vector<4x128xf32>
    %331 = arith.subf %313, %287 : vector<4x128xf32>
    %332 = arith.mulf %318, %331 : vector<4x128xf32>
    %333 = arith.addf %287, %332 : vector<4x128xf32>
    %c7_i32_101 = arith.constant 7 : i32
    %c7_i32_102 = arith.constant 7 : i32
    %334 = arith.subi %c7_i32_102, %c7_i32_101 : i32
    %335 = arith.index_cast %c7_i32_101 : i32 to index
    %c0_103 = arith.constant 0 : index
    %c0_104 = arith.constant 0 : index
    %336 = vector.load %arg0[%335, %c0_103, %c0_104] : memref<8x4x256xf32, #tpu.memory_space<vmem>>, vector<1x4x256xf32>
    %337 = vector.shape_cast %336 : vector<1x4x256xf32> to vector<4x256xf32>
    %338 = arith.truncf %330 : vector<4x128xf32> to vector<4x128xbf16>
    %cst_105 = arith.constant dense<0.000000e+00> : vector<4x256xf32>
    %339 = tpu.matmul %338, %0, %cst_105 {dimension_numbers = #tpu.dot_dimension_numbers<[1], [0], [0], [1], [0, 0, 1, 1], [], []>} : vector<4x128xbf16>, vector<128x256xbf16>, vector<4x256xf32> -> vector<4x256xf32>
    %340 = arith.addf %337, %339 : vector<4x256xf32>
    %341 = vector.extract_strided_slice %340 {offsets = [0, 0], sizes = [4, 128], strides = [1, 1]} : vector<4x256xf32> to vector<4x128xf32>
    %342 = arith.negf %341 : vector<4x128xf32>
    %343 = math.exp %342 : vector<4x128xf32>
    %cst_106 = arith.constant 1.000000e+00 : f32
    %344 = vector.broadcast %cst_106 : f32 to vector<4x128xf32>
    %345 = arith.addf %344, %343 : vector<4x128xf32>
    %346 = arith.divf %344, %345 : vector<4x128xf32>
    %347 = vector.extract_strided_slice %340 {offsets = [0, 128], sizes = [4, 128], strides = [1, 1]} : vector<4x256xf32> to vector<4x128xf32>
    %348 = arith.negf %347 : vector<4x128xf32>
    %349 = math.exp %348 : vector<4x128xf32>
    %cst_107 = arith.constant 1.000000e+00 : f32
    %350 = vector.broadcast %cst_107 : f32 to vector<4x128xf32>
    %351 = arith.addf %350, %349 : vector<4x128xf32>
    %352 = arith.divf %350, %351 : vector<4x128xf32>
    %353 = math.tanh %347 : vector<4x128xf32>
    %354 = arith.select %5, %352, %353 : vector<4x128xi1>, vector<4x128xf32>
    %c64_i32_108 = arith.constant 64 : i32
    %355 = tpu.dynamic_rotate %354 by %c64_i32_108 dim 1 : vector<4x128xf32>, i32 -> vector<4x128xf32>
    %356 = arith.select %5, %355, %333 : vector<4x128xi1>, vector<4x128xf32>
    %357 = arith.mulf %346, %356 : vector<4x128xf32>
    %c64_i32_109 = arith.constant 64 : i32
    %358 = tpu.dynamic_rotate %357 by %c64_i32_109 dim 1 : vector<4x128xf32>, i32 -> vector<4x128xf32>
    %359 = arith.addf %357, %358 : vector<4x128xf32>
    %360 = math.tanh %359 : vector<4x128xf32>
    %361 = arith.mulf %354, %360 : vector<4x128xf32>
    %362 = arith.index_cast %c7_i32_101 : i32 to index
    %c0_110 = arith.constant 0 : index
    %c0_111 = arith.constant 0 : index
    %363 = vector.load %arg1[%362, %c0_110, %c0_111] : memref<8x4x128xf32, #tpu.memory_space<vmem>>, vector<1x4x128xf32>
    %364 = vector.shape_cast %363 : vector<1x4x128xf32> to vector<4x128xf32>
    %365 = arith.mulf %364, %361 : vector<4x128xf32>
    %366 = arith.index_cast %c7_i32_101 : i32 to index
    %c0_112 = arith.constant 0 : index
    %c0_113 = arith.constant 0 : index
    %367 = vector.load %arg9[%366, %c0_112, %c0_113] : memref<8x4x128xf32, #tpu.memory_space<vmem>>, vector<1x4x128xf32>
    %368 = vector.shape_cast %367 : vector<1x4x128xf32> to vector<4x128xf32>
    %369 = vector.shape_cast %365 : vector<4x128xf32> to vector<1x4x128xf32>
    tpu.vector_store %arg9[%366, %c0_112, %c0_113], %369 {strides = array<i32>} : memref<8x4x128xf32, #tpu.memory_space<vmem>>, vector<1x4x128xf32>,
    %370 = arith.index_cast %334 : i32 to index
    %c0_114 = arith.constant 0 : index
    %c0_115 = arith.constant 0 : index
    %371 = vector.load %arg10[%370, %c0_114, %c0_115] : memref<8x4x128xf32, #tpu.memory_space<vmem>>, vector<1x4x128xf32>
    %372 = vector.shape_cast %371 : vector<1x4x128xf32> to vector<4x128xf32>
    %373 = vector.shape_cast %365 : vector<4x128xf32> to vector<1x4x128xf32>
    tpu.vector_store %arg10[%370, %c0_114, %c0_115], %373 {strides = array<i32>} : memref<8x4x128xf32, #tpu.memory_space<vmem>>, vector<1x4x128xf32>,
    %374 = arith.subf %361, %330 : vector<4x128xf32>
    %375 = arith.mulf %364, %374 : vector<4x128xf32>
    %376 = arith.addf %330, %375 : vector<4x128xf32>
    %377 = arith.subf %359, %333 : vector<4x128xf32>
    %378 = arith.mulf %364, %377 : vector<4x128xf32>
    %379 = arith.addf %333, %378 : vector<4x128xf32>
    %c8_i32 = arith.constant 8 : i32
    %c0_116 = arith.constant 0 : index
    %c0_117 = arith.constant 0 : index
    %c0_118 = arith.constant 0 : index
    %380 = vector.load %arg9[%c0_116, %c0_117, %c0_118] : memref<8x4x128xf32, #tpu.memory_space<vmem>>, vector<8x4x128xf32>
    %381 = vector.extract_strided_slice %380 {offsets = [0, 0, 0], sizes = [8, 4, 64], strides = [1, 1, 1]} : vector<8x4x128xf32> to vector<8x4x64xf32>
    %c0_119 = arith.constant 0 : index
    %c0_120 = arith.constant 0 : index
    %c0_121 = arith.constant 0 : index
    %382 = vector.load %arg10[%c0_119, %c0_120, %c0_121] : memref<8x4x128xf32, #tpu.memory_space<vmem>>, vector<8x4x128xf32>
    %383 = vector.extract_strided_slice %382 {offsets = [0, 0, 0], sizes = [8, 4, 64], strides = [1, 1, 1]} : vector<8x4x128xf32> to vector<8x4x64xf32>
    %384 = tpu.iota {dimensions = array<i32: 2>} : vector<1x1x64xi32>
    %c32_i32 = arith.constant 32 : i32
    %385 = vector.broadcast %c32_i32 : i32 to vector<1x1x64xi32>
    %386 = arith.cmpi slt, %384, %385 : vector<1x1x64xi32>
    %387 = vector.shape_cast %386 : vector<1x1x64xi1> to vector<1x1x64xi1>
    %388 = vector.broadcast %387 : vector<1x1x64xi1> to vector<8x4x64xi1>
    %389 = arith.select %388, %381, %383 : vector<8x4x64xi1>, vector<8x4x64xf32>
    %390 = vector.shape_cast %389 : vector<8x4x64xf32> to vector<32x64xf32>
    %391 = arith.truncf %390 : vector<32x64xf32> to vector<32x64xbf16>
    %c0_122 = arith.constant 0 : index
    %c0_123 = arith.constant 0 : index
    %392 = vector.load %arg5[%c0_122, %c0_123] : memref<64x64xbf16, #tpu.memory_space<vmem>>, vector<64x64xbf16>
    %cst_124 = arith.constant dense<0.000000e+00> : vector<32x64xf32>
    %393 = tpu.matmul %391, %392, %cst_124 {dimension_numbers = #tpu.dot_dimension_numbers<[1], [0], [0], [1], [0, 0, 1, 1], [], []>} : vector<32x64xbf16>, vector<64x64xbf16>, vector<32x64xf32> -> vector<32x64xf32>
    %c0_125 = arith.constant 0 : index
    %c0_126 = arith.constant 0 : index
    %394 = vector.load %arg6[%c0_125, %c0_126] : memref<1x64xf32, #tpu.memory_space<vmem>>, vector<1x64xf32>
    %395 = vector.broadcast %394 : vector<1x64xf32> to vector<32x64xf32>
    %396 = arith.addf %393, %395 : vector<32x64xf32>
    %397 = math.tanh %396 : vector<32x64xf32>
    %398 = vector.shape_cast %397 : vector<32x64xf32> to vector<8x4x64xf32>
    %c0_127 = arith.constant 0 : index
    %c0_128 = arith.constant 0 : index
    %399 = vector.load %arg7[%c0_127, %c0_128] : memref<1x64xf32, #tpu.memory_space<vmem>>, vector<1x64xf32>
    %400 = vector.shape_cast %399 : vector<1x64xf32> to vector<1x1x64xf32>
    %401 = vector.broadcast %400 : vector<1x1x64xf32> to vector<8x4x64xf32>
    %402 = arith.mulf %398, %401 : vector<8x4x64xf32>
    %cst_129 = arith.constant dense<0.000000e+00> : vector<8x4xf32>
    %403 = vector.multi_reduction <add>, %402, %cst_129 [2] : vector<8x4x64xf32> to vector<8x4xf32>
    %404 = vector.shape_cast %403 : vector<8x4xf32> to vector<8x4x1xf32>
    %cst_130 = arith.constant 9.99999993E-9 : f32
    %405 = vector.broadcast %cst_130 : f32 to vector<8x4x1xf32>
    %406 = arith.addf %404, %405 : vector<8x4x1xf32>
    %cst_131 = arith.constant dense<0xFF800000> : vector<8x1xf32>
    %407 = vector.multi_reduction <maximumf>, %406, %cst_131 [1] : vector<8x4x1xf32> to vector<8x1xf32>
    %408 = vector.shape_cast %407 : vector<8x1xf32> to vector<8x1x1xf32>
    %409 = vector.broadcast %408 : vector<8x1x1xf32> to vector<8x4x1xf32>
    %410 = arith.subf %406, %409 : vector<8x4x1xf32>
    %411 = math.exp %410 : vector<8x4x1xf32>
    %cst_132 = arith.constant dense<0.000000e+00> : vector<8x1xf32>
    %412 = vector.multi_reduction <add>, %411, %cst_132 [1] : vector<8x4x1xf32> to vector<8x1xf32>
    %413 = vector.shape_cast %412 : vector<8x1xf32> to vector<8x1x1xf32>
    %414 = tpu.reciprocal %413 : vector<8x1x1xf32> -> vector<8x1x1xf32>
    %415 = vector.broadcast %414 : vector<8x1x1xf32> to vector<8x4x1xf32>
    %416 = arith.mulf %411, %415 : vector<8x4x1xf32>
    %cst_133 = arith.constant 9.99999993E-9 : f32
    %417 = vector.broadcast %cst_133 : f32 to vector<8x4x1xf32>
    %418 = arith.addf %416, %417 : vector<8x4x1xf32>
    %419 = vector.broadcast %418 : vector<8x4x1xf32> to vector<8x4x64xf32>
    %420 = arith.mulf %419, %389 : vector<8x4x64xf32>
    %cst_134 = arith.constant dense<0.000000e+00> : vector<4x64xf32>
    %421 = vector.multi_reduction <add>, %420, %cst_134 [0] : vector<8x4x64xf32> to vector<4x64xf32>
    %c0_135 = arith.constant 0 : index
    %c0_136 = arith.constant 0 : index
    %422 = vector.load %arg8[%c0_135, %c0_136] : memref<4x64xf32, #tpu.memory_space<vmem>>, vector<4x64xf32>
    tpu.vector_store %arg8[%c0_135, %c0_136], %421 {strides = array<i32>} : memref<4x64xf32, #tpu.memory_space<vmem>>, vector<4x64xf32>,
    return
  }
}

</mosaic_0001>

<llo_original>
// kernel: word_to_sent_forward.1
$region0: #{word_to_sent_forward.1}
  #allocation0 [shape = 'u32[]', space=smem, size = 0x4, offset = 0x4, fixed_abs, tag = 'smem constant byte address 0x4 - core index']
  #allocation1 [shape = 'u32[72,128]{1,0:T(1,128)}', space=vmem, size = 0x9000, scoped, tag = 'internal scratch']
  #allocation2 [shape = 'f32[8,4,128]{2,1,0:T(4,128)}', space=vmem, size = 0x4000, scoped, tag = 'scratch operand']
  #allocation3 [shape = 'f32[8,4,128]{2,1,0:T(4,128)}', space=vmem, size = 0x4000, scoped, tag = 'scratch operand']
  %s0 = inlined_call_operand.vmem [shape: f32[8,4,256], index: 0, kind: input, shape index: {}]
  %s1 = inlined_call_operand.vmem [shape: f32[8,4,128], index: 1, kind: input, shape index: {}]
  %s2 = inlined_call_operand.vmem [shape: bf16[128,256], index: 2, kind: input, shape index: {}]
  %s3 = inlined_call_operand.vmem [shape: f32[1,128], index: 3, kind: input, shape index: {}]
  %s4 = inlined_call_operand.vmem [shape: f32[1,128], index: 4, kind: input, shape index: {}]
  %s5 = inlined_call_operand.vmem [shape: bf16[64,64], index: 5, kind: input, shape index: {}]
  %s6 = inlined_call_operand.vmem [shape: f32[1,64], index: 6, kind: input, shape index: {}]
  %s7 = inlined_call_operand.vmem [shape: f32[1,64], index: 7, kind: input, shape index: {}]
  %s8 = inlined_call_operand.hbm [shape: f32[4,64], index: 8, kind: output, shape index: {}]
  %s9 = sld [smem:[#allocation0]]
  $region42: #{word_to_sent_forward.1} parent=0
    _
  %s11 = ssub.s32 1, %s9
  %s12 = scalar_select 0, %s11, %s9
  $region1: #{word_to_sent_forward.1} parent=0
    #allocation4 [shape = 'u8[2048]{0}', space=vmem, size = 0x800, scoped, tag = 'output window, operand 0, single buffered']
    #allocation5 [shape = 's32[1]{0}', space=sflag, size = 0x4, scoped, tag = 'scoped memory for word_to_sent_forward.1']
    %13 = vsyncpa [#allocation5], 0
    // Predicated region
    $region2: #{word_to_sent_forward.1} parent=1 // pred_check
      _
    $region3: #{word_to_sent_forward.1} parent=1 // pred_check_branch
      %15 = sbr.rel (0) target = $region5
    $region4: #{word_to_sent_forward.1} parent=1 // pred_region
      _
    $region5: #{word_to_sent_forward.1} parent=1 // pred_fallthru
      _
    // Predicated region
    $region6: #{word_to_sent_forward.1} parent=1 // pred_check
      _
    $region7: #{word_to_sent_forward.1} parent=1 // pred_check_branch
      %17 = sbr.rel (0) target = $region9
    $region8: #{word_to_sent_forward.1} parent=1 // pred_region
      _
    $region9: #{word_to_sent_forward.1} parent=1 // pred_fallthru
      _
    // Predicated region
    $region10: #{word_to_sent_forward.1} parent=1 // pred_check
      _
    $region11: #{word_to_sent_forward.1} parent=1 // pred_check_branch
      %19 = sbr.rel (0) target = $region13
    $region12: #{word_to_sent_forward.1} parent=1 // pred_region
      _
    $region13: #{word_to_sent_forward.1} parent=1 // pred_fallthru
      _
    // Predicated region
    $region14: #{word_to_sent_forward.1} parent=1 // pred_check
      _
    $region15: #{word_to_sent_forward.1} parent=1 // pred_check_branch
      %21 = sbr.rel (0) target = $region17
    $region16: #{word_to_sent_forward.1} parent=1 // pred_region
      _
    $region17: #{word_to_sent_forward.1} parent=1 // pred_fallthru
      _
    // Predicated region
    $region18: #{word_to_sent_forward.1} parent=1 // pred_check
      _
    $region19: #{word_to_sent_forward.1} parent=1 // pred_check_branch
      %23 = sbr.rel (0) target = $region21
    $region20: #{word_to_sent_forward.1} parent=1 // pred_region
      _
    $region21: #{word_to_sent_forward.1} parent=1 // pred_fallthru
      _
    // Predicated region
    $region22: #{word_to_sent_forward.1} parent=1 // pred_check
      _
    $region23: #{word_to_sent_forward.1} parent=1 // pred_check_branch
      %25 = sbr.rel (0) target = $region25
    $region24: #{word_to_sent_forward.1} parent=1 // pred_region
      _
    $region25: #{word_to_sent_forward.1} parent=1 // pred_fallthru
      _
    // Predicated region
    $region26: #{word_to_sent_forward.1} parent=1 // pred_check
      _
    $region27: #{word_to_sent_forward.1} parent=1 // pred_check_branch
      %27 = sbr.rel (0) target = $region29
    $region28: #{word_to_sent_forward.1} parent=1 // pred_region
      _
    $region29: #{word_to_sent_forward.1} parent=1 // pred_fallthru
      _
    // Predicated region
    $region30: #{word_to_sent_forward.1} parent=1 // pred_check
      _
    $region31: #{word_to_sent_forward.1} parent=1 // pred_check_branch
      %29 = sbr.rel (0) target = $region33
    $region32: #{word_to_sent_forward.1} parent=1 // pred_region
      _
    $region33: #{word_to_sent_forward.1} parent=1 // pred_fallthru
      _
    %v31 = vld [vmem:[%s2] sm:$0xff]
    %v32 = vld [vmem:[%s2 + $0x8] sm:$0xff]
    %v33 = vld [vmem:[%s2 + $0x10] sm:$0xff]
    %v34 = vld [vmem:[%s2 + $0x18] sm:$0xff]
    %v35 = vld [vmem:[%s2 + $0x20] sm:$0xff]
    %v36 = vld [vmem:[%s2 + $0x28] sm:$0xff]
    %v37 = vld [vmem:[%s2 + $0x30] sm:$0xff]
    %v38 = vld [vmem:[%s2 + $0x38] sm:$0xff]
    %v39 = vld [vmem:[%s2 + $0x40] sm:$0xff]
    %v40 = vld [vmem:[%s2 + $0x48] sm:$0xff]
    %v41 = vld [vmem:[%s2 + $0x50] sm:$0xff]
    %v42 = vld [vmem:[%s2 + $0x58] sm:$0xff]
    %v43 = vld [vmem:[%s2 + $0x60] sm:$0xff]
    %v44 = vld [vmem:[%s2 + $0x68] sm:$0xff]
    %v45 = vld [vmem:[%s2 + $0x70] sm:$0xff]
    %v46 = vld [vmem:[%s2 + $0x78] sm:$0xff]
    %v47 = vlaneseq
    %v48 = vand.u32 %v47, 127
    %vm49 = vcmp.lt.s32.totalorder %v48, 64
    %v50 = vsel %vm49, 1, 0
    %vm51 = vcmp.eq.s32.totalorder %v50, 1
    %v52 = vld [vmem:[%s3] sm:$0x1]
    %v54 = vperm.slane %v52, 0
    %v56 = vld [vmem:[%s4] sm:$0x1]
    %v58 = vperm.slane %v56, 0
    %v60 = vld [vmem:[%s0] sm:$0xff]
    %v61 = vpack.c.bf16 %v54, %v54
    %v78 = vunpack.c.l.b16 %v31
    %v79 = vunpack.c.h.b16 %v31
    %v80 = vunpack.c.l.b16 %v32
    %v81 = vunpack.c.h.b16 %v32
    %v82 = vunpack.c.l.b16 %v33
    %v83 = vunpack.c.h.b16 %v33
    %v84 = vunpack.c.l.b16 %v34
    %v85 = vunpack.c.h.b16 %v34
    %v86 = vunpack.c.l.b16 %v35
    %v87 = vunpack.c.h.b16 %v35
    %v88 = vunpack.c.l.b16 %v36
    %v89 = vunpack.c.h.b16 %v36
    %v90 = vunpack.c.l.b16 %v37
    %v91 = vunpack.c.h.b16 %v37
    %v92 = vunpack.c.l.b16 %v38
    %v93 = vunpack.c.h.b16 %v38
    %v94 = vunpack.c.l.b16 %v39
    %v95 = vunpack.c.h.b16 %v39
    %v96 = vunpack.c.l.b16 %v40
    %v97 = vunpack.c.h.b16 %v40
    %v98 = vunpack.c.l.b16 %v41
    %v99 = vunpack.c.h.b16 %v41
    %v100 = vunpack.c.l.b16 %v42
    %v101 = vunpack.c.h.b16 %v42
    %v102 = vunpack.c.l.b16 %v43
    %v103 = vunpack.c.h.b16 %v43
    %v104 = vunpack.c.l.b16 %v44
    %v105 = vunpack.c.h.b16 %v44
    %v106 = vunpack.c.l.b16 %v45
    %v107 = vunpack.c.h.b16 %v45
    %v108 = vunpack.c.l.b16 %v46
    %v109 = vunpack.c.h.b16 %v46
    %v110 = vpack.c.b16 %v80, %v78
    %v111 = vpack.c.b16 %v81, %v79
    %v112 = vpack.c.b16 %v84, %v82
    %v113 = vpack.c.b16 %v85, %v83
    %v114 = vpack.c.b16 %v88, %v86
    %v115 = vpack.c.b16 %v89, %v87
    %v116 = vpack.c.b16 %v92, %v90
    %v117 = vpack.c.b16 %v93, %v91
    %v118 = vpack.c.b16 %v96, %v94
    %v119 = vpack.c.b16 %v97, %v95
    %v120 = vpack.c.b16 %v100, %v98
    %v121 = vpack.c.b16 %v101, %v99
    %v122 = vpack.c.b16 %v104, %v102
    %v123 = vpack.c.b16 %v105, %v103
    %v124 = vpack.c.b16 %v108, %v106
    %v125 = vpack.c.b16 %v109, %v107
    %142 = vmatpush.bf16.msra.mxu0 %v124
    %143 = vmatpush.bf16.msra.mxu0 %v122
    %144 = vmatpush.bf16.msra.mxu0 %v120
    %145 = vmatpush.bf16.msra.mxu0 %v118
    %146 = vmatpush.bf16.msra.mxu0 %v116
    %147 = vmatpush.bf16.msra.mxu0 %v114
    %148 = vmatpush.bf16.msra.mxu0 %v112
    %149 = vmatpush.bf16.msra.mxu0 %v110
    %150 = vmatmul.bf16.gmra.mxu0 %v61
    %v151 = vpop.f32.mrf.mxu0
    %v152 = vadd.f32 0.0, %v151
    %v153 = vpop.f32.mrf.mxu0
    %154 = vdwg.mxu0
    %155 = vmatpush.bf16.msra.mxu0 %v125
    %156 = vmatpush.bf16.msra.mxu0 %v123
    %157 = vmatpush.bf16.msra.mxu0 %v121
    %158 = vmatpush.bf16.msra.mxu0 %v119
    %159 = vmatpush.bf16.msra.mxu0 %v117
    %160 = vmatpush.bf16.msra.mxu0 %v115
    %161 = vmatpush.bf16.msra.mxu0 %v113
    %162 = vmatpush.bf16.msra.mxu0 %v111
    %163 = vmatmul.bf16.gmra.mxu0 %v61
    %v164 = vpop.f32.mrf.mxu0
    %v165 = vadd.f32 0.0, %v164
    %v166 = vpop.f32.mrf.mxu0
    %167 = vdwg.mxu0
    %v170 = vrot.slane %v165, 4
    %vm171 = vcmask 1043456
    %v172 = vsel %vm171, %v152, %v170
    %v174 = vadd.f32 %v60, %v172
    %v175 = vxor.u32 %v174, 2147483648
    %v176 = vmul.f32 %v175, 1.442695
    %v177 = vpow.pop %v176
    %v178 = vadd.f32 %v177, 1.0
    %v179 = vrcp.pop %v178
    %v180 = vmul.f32 %v178, %v179
    %v181 = vsub.f32 1.0, %v180
    %v182 = vmul.f32 %v179, %v181
    %v183 = vadd.f32 %v179, %v182
    %vm184 = vweird.f32 %v178
    %vm185 = vweird.f32 %v179
    %vm186 = vmor %vm184, %vm185
    %v187 = vsel %vm186, %v179, %v183
    %v188 = vand.u32 2147483647, %v178
    %vm189 = vcmp.eq.f32.partialorder %v188, 8.507059e+37
    %v190 = vand.u32 %v178, 2147483648
    %v191 = vor.u32 1.1754944e-38, %v190
    %v192 = vsel %vm189, %v191, %v187
    %v193 = vmul.f32 1.0, %v192
    %v195 = vrot.slane %v174, 4
    %v197 = vxor.u32 %v195, 2147483648
    %v198 = vmul.f32 %v197, 1.442695
    %v199 = vpow.pop %v198
    %v200 = vadd.f32 %v199, 1.0
    %v201 = vrcp.pop %v200
    %v202 = vmul.f32 %v200, %v201
    %v203 = vsub.f32 1.0, %v202
    %v204 = vmul.f32 %v201, %v203
    %v205 = vadd.f32 %v201, %v204
    %vm206 = vweird.f32 %v200
    %vm207 = vweird.f32 %v201
    %vm208 = vmor %vm206, %vm207
    %v209 = vsel %vm208, %v201, %v205
    %v210 = vand.u32 2147483647, %v200
    %vm211 = vcmp.eq.f32.partialorder %v210, 8.507059e+37
    %v212 = vand.u32 %v200, 2147483648
    %v213 = vor.u32 1.1754944e-38, %v212
    %v214 = vsel %vm211, %v213, %v209
    %v215 = vmul.f32 1.0, %v214
    %v216 = vtanh.pop %v195
    %v217 = vsel %vm51, %v215, %v216
    %218 = vrot.lane.b32.xlu0 %v217, 64
    %v219 = vpop.permute.xlu0 %218
    %v220 = vsel %vm51, %v219, %v58
    %v221 = vmul.f32 %v193, %v220
    %222 = vrot.lane.b32.xlu0 %v221, 64
    %v223 = vpop.permute.xlu0 %222
    %v224 = vadd.f32 %v221, %v223
    %v225 = vtanh.pop %v224
    %v226 = vmul.f32 %v217, %v225
    %v227 = vld [vmem:[%s1] sm:$0xf]
    %v228 = vmul.f32 %v227, %v226
    %229 = vst [vmem:[#allocation2] sm:$0xf] %v228
    %s230 = scalar_lea.vmem [#allocation3], 28
    %231 = vst [vmem:[%s230] sm:$0xf] %v228
    %v232 = vsub.f32 %v226, %v54
    %v233 = vmul.f32 %v227, %v232
    %v234 = vadd.f32 %v54, %v233
    %v235 = vsub.f32 %v224, %v58
    %v236 = vmul.f32 %v227, %v235
    %v237 = vadd.f32 %v58, %v236
    %s238 = scalar_lea.vmem %s0, 8
    %v239 = vld [vmem:[%s238] sm:$0xff]
    %v240 = vpack.c.bf16 %v234, %v234
    %241 = vmatpush.bf16.msra.mxu0 %v124
    %242 = vmatpush.bf16.msra.mxu0 %v122
    %243 = vmatpush.bf16.msra.mxu0 %v120
    %244 = vmatpush.bf16.msra.mxu0 %v118
    %245 = vmatpush.bf16.msra.mxu0 %v116
    %246 = vmatpush.bf16.msra.mxu0 %v114
    %247 = vmatpush.bf16.msra.mxu0 %v112
    %248 = vmatpush.bf16.msra.mxu0 %v110
    %249 = vmatmul.bf16.gmra.mxu0 %v240
    %v250 = vpop.f32.mrf.mxu0
    %v251 = vadd.f32 0.0, %v250
    %v252 = vpop.f32.mrf.mxu0
    %253 = vdwg.mxu0
    %254 = vmatpush.bf16.msra.mxu0 %v125
    %255 = vmatpush.bf16.msra.mxu0 %v123
    %256 = vmatpush.bf16.msra.mxu0 %v121
    %257 = vmatpush.bf16.msra.mxu0 %v119
    %258 = vmatpush.bf16.msra.mxu0 %v117
    %259 = vmatpush.bf16.msra.mxu0 %v115
    %260 = vmatpush.bf16.msra.mxu0 %v113
    %261 = vmatpush.bf16.msra.mxu0 %v111
    %262 = vmatmul.bf16.gmra.mxu0 %v240
    %v263 = vpop.f32.mrf.mxu0
    %v264 = vadd.f32 0.0, %v263
    %v265 = vpop.f32.mrf.mxu0
    %266 = vdwg.mxu0
    %v269 = vrot.slane %v264, 4
    %v270 = vsel %vm171, %v251, %v269
    %v272 = vadd.f32 %v239, %v270
    %v273 = vxor.u32 %v272, 2147483648
    %v274 = vmul.f32 %v273, 1.442695
    %v275 = vpow.pop %v274
    %v276 = vadd.f32 %v275, 1.0
    %v277 = vrcp.pop %v276
    %v278 = vmul.f32 %v276, %v277
    %v279 = vsub.f32 1.0, %v278
    %v280 = vmul.f32 %v277, %v279
    %v281 = vadd.f32 %v277, %v280
    %vm282 = vweird.f32 %v276
    %vm283 = vweird.f32 %v277
    %vm284 = vmor %vm282, %vm283
    %v285 = vsel %vm284, %v277, %v281
    %v286 = vand.u32 2147483647, %v276
    %vm287 = vcmp.eq.f32.partialorder %v286, 8.507059e+37
    %v288 = vand.u32 %v276, 2147483648
    %v289 = vor.u32 1.1754944e-38, %v288
    %v290 = vsel %vm287, %v289, %v285
    %v291 = vmul.f32 1.0, %v290
    %v293 = vrot.slane %v272, 4
    %v295 = vxor.u32 %v293, 2147483648
    %v296 = vmul.f32 %v295, 1.442695
    %v297 = vpow.pop %v296
    %v298 = vadd.f32 %v297, 1.0
    %v299 = vrcp.pop %v298
    %v300 = vmul.f32 %v298, %v299
    %v301 = vsub.f32 1.0, %v300
    %v302 = vmul.f32 %v299, %v301
    %v303 = vadd.f32 %v299, %v302
    %vm304 = vweird.f32 %v298
    %vm305 = vweird.f32 %v299
    %vm306 = vmor %vm304, %vm305
    %v307 = vsel %vm306, %v299, %v303
    %v308 = vand.u32 2147483647, %v298
    %vm309 = vcmp.eq.f32.partialorder %v308, 8.507059e+37
    %v310 = vand.u32 %v298, 2147483648
    %v311 = vor.u32 1.1754944e-38, %v310
    %v312 = vsel %vm309, %v311, %v307
    %v313 = vmul.f32 1.0, %v312
    %v314 = vtanh.pop %v293
    %v315 = vsel %vm51, %v313, %v314
    %316 = vrot.lane.b32.xlu0 %v315, 64
    %v317 = vpop.permute.xlu0 %316
    %v318 = vsel %vm51, %v317, %v237
    %v319 = vmul.f32 %v291, %v318
    %320 = vrot.lane.b32.xlu0 %v319, 64
    %v321 = vpop.permute.xlu0 %320
    %v322 = vadd.f32 %v319, %v321
    %v323 = vtanh.pop %v322
    %v324 = vmul.f32 %v315, %v323
    %s325 = scalar_lea.vmem %s1, 4
    %v326 = vld [vmem:[%s325] sm:$0xf]
    %v327 = vmul.f32 %v326, %v324
    %s328 = scalar_lea.vmem [#allocation2], 4
    %329 = vst [vmem:[%s328] sm:$0xf] %v327
    %s330 = scalar_lea.vmem [#allocation3], 24
    %331 = vst [vmem:[%s330] sm:$0xf] %v327
    %v332 = vsub.f32 %v324, %v234
    %v333 = vmul.f32 %v326, %v332
    %v334 = vadd.f32 %v234, %v333
    %v335 = vsub.f32 %v322, %v237
    %v336 = vmul.f32 %v326, %v335
    %v337 = vadd.f32 %v237, %v336
    %s338 = scalar_lea.vmem %s0, 16
    %v339 = vld [vmem:[%s338] sm:$0xff]
    %v340 = vpack.c.bf16 %v334, %v334
    %341 = vmatpush.bf16.msra.mxu0 %v124
    %342 = vmatpush.bf16.msra.mxu0 %v122
    %343 = vmatpush.bf16.msra.mxu0 %v120
    %344 = vmatpush.bf16.msra.mxu0 %v118
    %345 = vmatpush.bf16.msra.mxu0 %v116
    %346 = vmatpush.bf16.msra.mxu0 %v114
    %347 = vmatpush.bf16.msra.mxu0 %v112
    %348 = vmatpush.bf16.msra.mxu0 %v110
    %349 = vmatmul.bf16.gmra.mxu0 %v340
    %v350 = vpop.f32.mrf.mxu0
    %v351 = vadd.f32 0.0, %v350
    %v352 = vpop.f32.mrf.mxu0
    %353 = vdwg.mxu0
    %354 = vmatpush.bf16.msra.mxu0 %v125
    %355 = vmatpush.bf16.msra.mxu0 %v123
    %356 = vmatpush.bf16.msra.mxu0 %v121
    %357 = vmatpush.bf16.msra.mxu0 %v119
    %358 = vmatpush.bf16.msra.mxu0 %v117
    %359 = vmatpush.bf16.msra.mxu0 %v115
    %360 = vmatpush.bf16.msra.mxu0 %v113
    %361 = vmatpush.bf16.msra.mxu0 %v111
    %362 = vmatmul.bf16.gmra.mxu0 %v340
    %v363 = vpop.f32.mrf.mxu0
    %v364 = vadd.f32 0.0, %v363
    %v365 = vpop.f32.mrf.mxu0
    %366 = vdwg.mxu0
    %v369 = vrot.slane %v364, 4
    %v370 = vsel %vm171, %v351, %v369
    %v372 = vadd.f32 %v339, %v370
    %v373 = vxor.u32 %v372, 2147483648
    %v374 = vmul.f32 %v373, 1.442695
    %v375 = vpow.pop %v374
    %v376 = vadd.f32 %v375, 1.0
    %v377 = vrcp.pop %v376
    %v378 = vmul.f32 %v376, %v377
    %v379 = vsub.f32 1.0, %v378
    %v380 = vmul.f32 %v377, %v379
    %v381 = vadd.f32 %v377, %v380
    %vm382 = vweird.f32 %v376
    %vm383 = vweird.f32 %v377
    %vm384 = vmor %vm382, %vm383
    %v385 = vsel %vm384, %v377, %v381
    %v386 = vand.u32 2147483647, %v376
    %vm387 = vcmp.eq.f32.partialorder %v386, 8.507059e+37
    %v388 = vand.u32 %v376, 2147483648
    %v389 = vor.u32 1.1754944e-38, %v388
    %v390 = vsel %vm387, %v389, %v385
    %v391 = vmul.f32 1.0, %v390
    %v393 = vrot.slane %v372, 4
    %v395 = vxor.u32 %v393, 2147483648
    %v396 = vmul.f32 %v395, 1.442695
    %v397 = vpow.pop %v396
    %v398 = vadd.f32 %v397, 1.0
    %v399 = vrcp.pop %v398
    %v400 = vmul.f32 %v398, %v399
    %v401 = vsub.f32 1.0, %v400
    %v402 = vmul.f32 %v399, %v401
    %v403 = vadd.f32 %v399, %v402
    %vm404 = vweird.f32 %v398
    %vm405 = vweird.f32 %v399
    %vm406 = vmor %vm404, %vm405
    %v407 = vsel %vm406, %v399, %v403
    %v408 = vand.u32 2147483647, %v398
    %vm409 = vcmp.eq.f32.partialorder %v408, 8.507059e+37
    %v410 = vand.u32 %v398, 2147483648
    %v411 = vor.u32 1.1754944e-38, %v410
    %v412 = vsel %vm409, %v411, %v407
    %v413 = vmul.f32 1.0, %v412
    %v414 = vtanh.pop %v393
    %v415 = vsel %vm51, %v413, %v414
    %416 = vrot.lane.b32.xlu0 %v415, 64
    %v417 = vpop.permute.xlu0 %416
    %v418 = vsel %vm51, %v417, %v337
    %v419 = vmul.f32 %v391, %v418
    %420 = vrot.lane.b32.xlu0 %v419, 64
    %v421 = vpop.permute.xlu0 %420
    %v422 = vadd.f32 %v419, %v421
    %v423 = vtanh.pop %v422
    %v424 = vmul.f32 %v415, %v423
    %s425 = scalar_lea.vmem %s1, 8
    %v426 = vld [vmem:[%s425] sm:$0xf]
    %v427 = vmul.f32 %v426, %v424
    %s428 = scalar_lea.vmem [#allocation2], 8
    %429 = vst [vmem:[%s428] sm:$0xf] %v427
    %s430 = scalar_lea.vmem [#allocation3], 20
    %431 = vst [vmem:[%s430] sm:$0xf] %v427
    %v432 = vsub.f32 %v424, %v334
    %v433 = vmul.f32 %v426, %v432
    %v434 = vadd.f32 %v334, %v433
    %v435 = vsub.f32 %v422, %v337
    %v436 = vmul.f32 %v426, %v435
    %v437 = vadd.f32 %v337, %v436
    %s438 = scalar_lea.vmem %s0, 24
    %v439 = vld [vmem:[%s438] sm:$0xff]
    %v440 = vpack.c.bf16 %v434, %v434
    %441 = vmatpush.bf16.msra.mxu0 %v124
    %442 = vmatpush.bf16.msra.mxu0 %v122
    %443 = vmatpush.bf16.msra.mxu0 %v120
    %444 = vmatpush.bf16.msra.mxu0 %v118
    %445 = vmatpush.bf16.msra.mxu0 %v116
    %446 = vmatpush.bf16.msra.mxu0 %v114
    %447 = vmatpush.bf16.msra.mxu0 %v112
    %448 = vmatpush.bf16.msra.mxu0 %v110
    %449 = vmatmul.bf16.gmra.mxu0 %v440
    %v450 = vpop.f32.mrf.mxu0
    %v451 = vadd.f32 0.0, %v450
    %v452 = vpop.f32.mrf.mxu0
    %453 = vdwg.mxu0
    %454 = vmatpush.bf16.msra.mxu0 %v125
    %455 = vmatpush.bf16.msra.mxu0 %v123
    %456 = vmatpush.bf16.msra.mxu0 %v121
    %457 = vmatpush.bf16.msra.mxu0 %v119
    %458 = vmatpush.bf16.msra.mxu0 %v117
    %459 = vmatpush.bf16.msra.mxu0 %v115
    %460 = vmatpush.bf16.msra.mxu0 %v113
    %461 = vmatpush.bf16.msra.mxu0 %v111
    %462 = vmatmul.bf16.gmra.mxu0 %v440
    %v463 = vpop.f32.mrf.mxu0
    %v464 = vadd.f32 0.0, %v463
    %v465 = vpop.f32.mrf.mxu0
    %466 = vdwg.mxu0
    %v469 = vrot.slane %v464, 4
    %v470 = vsel %vm171, %v451, %v469
    %v472 = vadd.f32 %v439, %v470
    %v473 = vxor.u32 %v472, 2147483648
    %v474 = vmul.f32 %v473, 1.442695
    %v475 = vpow.pop %v474
    %v476 = vadd.f32 %v475, 1.0
    %v477 = vrcp.pop %v476
    %v478 = vmul.f32 %v476, %v477
    %v479 = vsub.f32 1.0, %v478
    %v480 = vmul.f32 %v477, %v479
    %v481 = vadd.f32 %v477, %v480
    %vm482 = vweird.f32 %v476
    %vm483 = vweird.f32 %v477
    %vm484 = vmor %vm482, %vm483
    %v485 = vsel %vm484, %v477, %v481
    %v486 = vand.u32 2147483647, %v476
    %vm487 = vcmp.eq.f32.partialorder %v486, 8.507059e+37
    %v488 = vand.u32 %v476, 2147483648
    %v489 = vor.u32 1.1754944e-38, %v488
    %v490 = vsel %vm487, %v489, %v485
    %v491 = vmul.f32 1.0, %v490
    %v493 = vrot.slane %v472, 4
    %v495 = vxor.u32 %v493, 2147483648
    %v496 = vmul.f32 %v495, 1.442695
    %v497 = vpow.pop %v496
    %v498 = vadd.f32 %v497, 1.0
    %v499 = vrcp.pop %v498
    %v500 = vmul.f32 %v498, %v499
    %v501 = vsub.f32 1.0, %v500
    %v502 = vmul.f32 %v499, %v501
    %v503 = vadd.f32 %v499, %v502
    %vm504 = vweird.f32 %v498
    %vm505 = vweird.f32 %v499
    %vm506 = vmor %vm504, %vm505
    %v507 = vsel %vm506, %v499, %v503
    %v508 = vand.u32 2147483647, %v498
    %vm509 = vcmp.eq.f32.partialorder %v508, 8.507059e+37
    %v510 = vand.u32 %v498, 2147483648
    %v511 = vor.u32 1.1754944e-38, %v510
    %v512 = vsel %vm509, %v511, %v507
    %v513 = vmul.f32 1.0, %v512
    %v514 = vtanh.pop %v493
    %v515 = vsel %vm51, %v513, %v514
    %516 = vrot.lane.b32.xlu0 %v515, 64
    %v517 = vpop.permute.xlu0 %516
    %v518 = vsel %vm51, %v517, %v437
    %v519 = vmul.f32 %v491, %v518
    %520 = vrot.lane.b32.xlu0 %v519, 64
    %v521 = vpop.permute.xlu0 %520
    %v522 = vadd.f32 %v519, %v521
    %v523 = vtanh.pop %v522
    %v524 = vmul.f32 %v515, %v523
    %s525 = scalar_lea.vmem %s1, 12
    %v526 = vld [vmem:[%s525] sm:$0xf]
    %v527 = vmul.f32 %v526, %v524
    %s528 = scalar_lea.vmem [#allocation2], 12
    %529 = vst [vmem:[%s528] sm:$0xf] %v527
    %s530 = scalar_lea.vmem [#allocation3], 16
    %531 = vst [vmem:[%s530] sm:$0xf] %v527
    %v532 = vsub.f32 %v524, %v434
    %v533 = vmul.f32 %v526, %v532
    %v534 = vadd.f32 %v434, %v533
    %v535 = vsub.f32 %v522, %v437
    %v536 = vmul.f32 %v526, %v535
    %v537 = vadd.f32 %v437, %v536
    %s538 = scalar_lea.vmem %s0, 32
    %v539 = vld [vmem:[%s538] sm:$0xff]
    %v540 = vpack.c.bf16 %v534, %v534
    %541 = vmatpush.bf16.msra.mxu0 %v124
    %542 = vmatpush.bf16.msra.mxu0 %v122
    %543 = vmatpush.bf16.msra.mxu0 %v120
    %544 = vmatpush.bf16.msra.mxu0 %v118
    %545 = vmatpush.bf16.msra.mxu0 %v116
    %546 = vmatpush.bf16.msra.mxu0 %v114
    %547 = vmatpush.bf16.msra.mxu0 %v112
    %548 = vmatpush.bf16.msra.mxu0 %v110
    %549 = vmatmul.bf16.gmra.mxu0 %v540
    %v550 = vpop.f32.mrf.mxu0
    %v551 = vadd.f32 0.0, %v550
    %v552 = vpop.f32.mrf.mxu0
    %553 = vdwg.mxu0
    %554 = vmatpush.bf16.msra.mxu0 %v125
    %555 = vmatpush.bf16.msra.mxu0 %v123
    %556 = vmatpush.bf16.msra.mxu0 %v121
    %557 = vmatpush.bf16.msra.mxu0 %v119
    %558 = vmatpush.bf16.msra.mxu0 %v117
    %559 = vmatpush.bf16.msra.mxu0 %v115
    %560 = vmatpush.bf16.msra.mxu0 %v113
    %561 = vmatpush.bf16.msra.mxu0 %v111
    %562 = vmatmul.bf16.gmra.mxu0 %v540
    %v563 = vpop.f32.mrf.mxu0
    %v564 = vadd.f32 0.0, %v563
    %v565 = vpop.f32.mrf.mxu0
    %566 = vdwg.mxu0
    %v569 = vrot.slane %v564, 4
    %v570 = vsel %vm171, %v551, %v569
    %v572 = vadd.f32 %v539, %v570
    %v573 = vxor.u32 %v572, 2147483648
    %v574 = vmul.f32 %v573, 1.442695
    %v575 = vpow.pop %v574
    %v576 = vadd.f32 %v575, 1.0
    %v577 = vrcp.pop %v576
    %v578 = vmul.f32 %v576, %v577
    %v579 = vsub.f32 1.0, %v578
    %v580 = vmul.f32 %v577, %v579
    %v581 = vadd.f32 %v577, %v580
    %vm582 = vweird.f32 %v576
    %vm583 = vweird.f32 %v577
    %vm584 = vmor %vm582, %vm583
    %v585 = vsel %vm584, %v577, %v581
    %v586 = vand.u32 2147483647, %v576
    %vm587 = vcmp.eq.f32.partialorder %v586, 8.507059e+37
    %v588 = vand.u32 %v576, 2147483648
    %v589 = vor.u32 1.1754944e-38, %v588
    %v590 = vsel %vm587, %v589, %v585
    %v591 = vmul.f32 1.0, %v590
    %v593 = vrot.slane %v572, 4
    %v595 = vxor.u32 %v593, 2147483648
    %v596 = vmul.f32 %v595, 1.442695
    %v597 = vpow.pop %v596
    %v598 = vadd.f32 %v597, 1.0
    %v599 = vrcp.pop %v598
    %v600 = vmul.f32 %v598, %v599
    %v601 = vsub.f32 1.0, %v600
    %v602 = vmul.f32 %v599, %v601
    %v603 = vadd.f32 %v599, %v602
    %vm604 = vweird.f32 %v598
    %vm605 = vweird.f32 %v599
    %vm606 = vmor %vm604, %vm605
    %v607 = vsel %vm606, %v599, %v603
    %v608 = vand.u32 2147483647, %v598
    %vm609 = vcmp.eq.f32.partialorder %v608, 8.507059e+37
    %v610 = vand.u32 %v598, 2147483648
    %v611 = vor.u32 1.1754944e-38, %v610
    %v612 = vsel %vm609, %v611, %v607
    %v613 = vmul.f32 1.0, %v612
    %v614 = vtanh.pop %v593
    %v615 = vsel %vm51, %v613, %v614
    %616 = vrot.lane.b32.xlu0 %v615, 64
    %v617 = vpop.permute.xlu0 %616
    %v618 = vsel %vm51, %v617, %v537
    %v619 = vmul.f32 %v591, %v618
    %620 = vrot.lane.b32.xlu0 %v619, 64
    %v621 = vpop.permute.xlu0 %620
    %v622 = vadd.f32 %v619, %v621
    %v623 = vtanh.pop %v622
    %v624 = vmul.f32 %v615, %v623
    %s625 = scalar_lea.vmem %s1, 16
    %v626 = vld [vmem:[%s625] sm:$0xf]
    %v627 = vmul.f32 %v626, %v624
    %s628 = scalar_lea.vmem [#allocation2], 16
    %629 = vst [vmem:[%s628] sm:$0xf] %v627
    %s630 = scalar_lea.vmem [#allocation3], 12
    %631 = vst [vmem:[%s630] sm:$0xf] %v627
    %v632 = vsub.f32 %v624, %v534
    %v633 = vmul.f32 %v626, %v632
    %v634 = vadd.f32 %v534, %v633
    %v635 = vsub.f32 %v622, %v537
    %v636 = vmul.f32 %v626, %v635
    %v637 = vadd.f32 %v537, %v636
    %s638 = scalar_lea.vmem %s0, 40
    %v639 = vld [vmem:[%s638] sm:$0xff]
    %v640 = vpack.c.bf16 %v634, %v634
    %641 = vmatpush.bf16.msra.mxu0 %v124
    %642 = vmatpush.bf16.msra.mxu0 %v122
    %643 = vmatpush.bf16.msra.mxu0 %v120
    %644 = vmatpush.bf16.msra.mxu0 %v118
    %645 = vmatpush.bf16.msra.mxu0 %v116
    %646 = vmatpush.bf16.msra.mxu0 %v114
    %647 = vmatpush.bf16.msra.mxu0 %v112
    %648 = vmatpush.bf16.msra.mxu0 %v110
    %649 = vmatmul.bf16.gmra.mxu0 %v640
    %v650 = vpop.f32.mrf.mxu0
    %v651 = vadd.f32 0.0, %v650
    %v652 = vpop.f32.mrf.mxu0
    %653 = vdwg.mxu0
    %654 = vmatpush.bf16.msra.mxu0 %v125
    %655 = vmatpush.bf16.msra.mxu0 %v123
    %656 = vmatpush.bf16.msra.mxu0 %v121
    %657 = vmatpush.bf16.msra.mxu0 %v119
    %658 = vmatpush.bf16.msra.mxu0 %v117
    %659 = vmatpush.bf16.msra.mxu0 %v115
    %660 = vmatpush.bf16.msra.mxu0 %v113
    %661 = vmatpush.bf16.msra.mxu0 %v111
    %662 = vmatmul.bf16.gmra.mxu0 %v640
    %v663 = vpop.f32.mrf.mxu0
    %v664 = vadd.f32 0.0, %v663
    %v665 = vpop.f32.mrf.mxu0
    %666 = vdwg.mxu0
    %v669 = vrot.slane %v664, 4
    %v670 = vsel %vm171, %v651, %v669
    %v672 = vadd.f32 %v639, %v670
    %v673 = vxor.u32 %v672, 2147483648
    %v674 = vmul.f32 %v673, 1.442695
    %v675 = vpow.pop %v674
    %v676 = vadd.f32 %v675, 1.0
    %v677 = vrcp.pop %v676
    %v678 = vmul.f32 %v676, %v677
    %v679 = vsub.f32 1.0, %v678
    %v680 = vmul.f32 %v677, %v679
    %v681 = vadd.f32 %v677, %v680
    %vm682 = vweird.f32 %v676
    %vm683 = vweird.f32 %v677
    %vm684 = vmor %vm682, %vm683
    %v685 = vsel %vm684, %v677, %v681
    %v686 = vand.u32 2147483647, %v676
    %vm687 = vcmp.eq.f32.partialorder %v686, 8.507059e+37
    %v688 = vand.u32 %v676, 2147483648
    %v689 = vor.u32 1.1754944e-38, %v688
    %v690 = vsel %vm687, %v689, %v685
    %v691 = vmul.f32 1.0, %v690
    %v693 = vrot.slane %v672, 4
    %v695 = vxor.u32 %v693, 2147483648
    %v696 = vmul.f32 %v695, 1.442695
    %v697 = vpow.pop %v696
    %v698 = vadd.f32 %v697, 1.0
    %v699 = vrcp.pop %v698
    %v700 = vmul.f32 %v698, %v699
    %v701 = vsub.f32 1.0, %v700
    %v702 = vmul.f32 %v699, %v701
    %v703 = vadd.f32 %v699, %v702
    %vm704 = vweird.f32 %v698
    %vm705 = vweird.f32 %v699
    %vm706 = vmor %vm704, %vm705
    %v707 = vsel %vm706, %v699, %v703
    %v708 = vand.u32 2147483647, %v698
    %vm709 = vcmp.eq.f32.partialorder %v708, 8.507059e+37
    %v710 = vand.u32 %v698, 2147483648
    %v711 = vor.u32 1.1754944e-38, %v710
    %v712 = vsel %vm709, %v711, %v707
    %v713 = vmul.f32 1.0, %v712
    %v714 = vtanh.pop %v693
    %v715 = vsel %vm51, %v713, %v714
    %716 = vrot.lane.b32.xlu0 %v715, 64
    %v717 = vpop.permute.xlu0 %716
    %v718 = vsel %vm51, %v717, %v637
    %v719 = vmul.f32 %v691, %v718
    %720 = vrot.lane.b32.xlu0 %v719, 64
    %v721 = vpop.permute.xlu0 %720
    %v722 = vadd.f32 %v719, %v721
    %v723 = vtanh.pop %v722
    %v724 = vmul.f32 %v715, %v723
    %s725 = scalar_lea.vmem %s1, 20
    %v726 = vld [vmem:[%s725] sm:$0xf]
    %v727 = vmul.f32 %v726, %v724
    %s728 = scalar_lea.vmem [#allocation2], 20
    %729 = vst [vmem:[%s728] sm:$0xf] %v727
    %s730 = scalar_lea.vmem [#allocation3], 8
    %731 = vst [vmem:[%s730] sm:$0xf] %v727
    %v732 = vsub.f32 %v724, %v634
    %v733 = vmul.f32 %v726, %v732
    %v734 = vadd.f32 %v634, %v733
    %v735 = vsub.f32 %v722, %v637
    %v736 = vmul.f32 %v726, %v735
    %v737 = vadd.f32 %v637, %v736
    %s738 = scalar_lea.vmem %s0, 48
    %v739 = vld [vmem:[%s738] sm:$0xff]
    %v740 = vpack.c.bf16 %v734, %v734
    %741 = vmatpush.bf16.msra.mxu0 %v124
    %742 = vmatpush.bf16.msra.mxu0 %v122
    %743 = vmatpush.bf16.msra.mxu0 %v120
    %744 = vmatpush.bf16.msra.mxu0 %v118
    %745 = vmatpush.bf16.msra.mxu0 %v116
    %746 = vmatpush.bf16.msra.mxu0 %v114
    %747 = vmatpush.bf16.msra.mxu0 %v112
    %748 = vmatpush.bf16.msra.mxu0 %v110
    %749 = vmatmul.bf16.gmra.mxu0 %v740
    %v750 = vpop.f32.mrf.mxu0
    %v751 = vadd.f32 0.0, %v750
    %v752 = vpop.f32.mrf.mxu0
    %753 = vdwg.mxu0
    %754 = vmatpush.bf16.msra.mxu0 %v125
    %755 = vmatpush.bf16.msra.mxu0 %v123
    %756 = vmatpush.bf16.msra.mxu0 %v121
    %757 = vmatpush.bf16.msra.mxu0 %v119
    %758 = vmatpush.bf16.msra.mxu0 %v117
    %759 = vmatpush.bf16.msra.mxu0 %v115
    %760 = vmatpush.bf16.msra.mxu0 %v113
    %761 = vmatpush.bf16.msra.mxu0 %v111
    %762 = vmatmul.bf16.gmra.mxu0 %v740
    %v763 = vpop.f32.mrf.mxu0
    %v764 = vadd.f32 0.0, %v763
    %v765 = vpop.f32.mrf.mxu0
    %766 = vdwg.mxu0
    %v769 = vrot.slane %v764, 4
    %v770 = vsel %vm171, %v751, %v769
    %v772 = vadd.f32 %v739, %v770
    %v773 = vxor.u32 %v772, 2147483648
    %v774 = vmul.f32 %v773, 1.442695
    %v775 = vpow.pop %v774
    %v776 = vadd.f32 %v775, 1.0
    %v777 = vrcp.pop %v776
    %v778 = vmul.f32 %v776, %v777
    %v779 = vsub.f32 1.0, %v778
    %v780 = vmul.f32 %v777, %v779
    %v781 = vadd.f32 %v777, %v780
    %vm782 = vweird.f32 %v776
    %vm783 = vweird.f32 %v777
    %vm784 = vmor %vm782, %vm783
    %v785 = vsel %vm784, %v777, %v781
    %v786 = vand.u32 2147483647, %v776
    %vm787 = vcmp.eq.f32.partialorder %v786, 8.507059e+37
    %v788 = vand.u32 %v776, 2147483648
    %v789 = vor.u32 1.1754944e-38, %v788
    %v790 = vsel %vm787, %v789, %v785
    %v791 = vmul.f32 1.0, %v790
    %v793 = vrot.slane %v772, 4
    %v795 = vxor.u32 %v793, 2147483648
    %v796 = vmul.f32 %v795, 1.442695
    %v797 = vpow.pop %v796
    %v798 = vadd.f32 %v797, 1.0
    %v799 = vrcp.pop %v798
    %v800 = vmul.f32 %v798, %v799
    %v801 = vsub.f32 1.0, %v800
    %v802 = vmul.f32 %v799, %v801
    %v803 = vadd.f32 %v799, %v802
    %vm804 = vweird.f32 %v798
    %vm805 = vweird.f32 %v799
    %vm806 = vmor %vm804, %vm805
    %v807 = vsel %vm806, %v799, %v803
    %v808 = vand.u32 2147483647, %v798
    %vm809 = vcmp.eq.f32.partialorder %v808, 8.507059e+37
    %v810 = vand.u32 %v798, 2147483648
    %v811 = vor.u32 1.1754944e-38, %v810
    %v812 = vsel %vm809, %v811, %v807
    %v813 = vmul.f32 1.0, %v812
    %v814 = vtanh.pop %v793
    %v815 = vsel %vm51, %v813, %v814
    %816 = vrot.lane.b32.xlu0 %v815, 64
    %v817 = vpop.permute.xlu0 %816
    %v818 = vsel %vm51, %v817, %v737
    %v819 = vmul.f32 %v791, %v818
    %820 = vrot.lane.b32.xlu0 %v819, 64
    %v821 = vpop.permute.xlu0 %820
    %v822 = vadd.f32 %v819, %v821
    %v823 = vtanh.pop %v822
    %v824 = vmul.f32 %v815, %v823
    %s825 = scalar_lea.vmem %s1, 24
    %v826 = vld [vmem:[%s825] sm:$0xf]
    %v827 = vmul.f32 %v826, %v824
    %s828 = scalar_lea.vmem [#allocation2], 24
    %829 = vst [vmem:[%s828] sm:$0xf] %v827
    %s830 = scalar_lea.vmem [#allocation3], 4
    %831 = vst [vmem:[%s830] sm:$0xf] %v827
    %v832 = vsub.f32 %v824, %v734
    %v833 = vmul.f32 %v826, %v832
    %v834 = vadd.f32 %v734, %v833
    %v835 = vsub.f32 %v822, %v737
    %v836 = vmul.f32 %v826, %v835
    %v837 = vadd.f32 %v737, %v836
    %s838 = scalar_lea.vmem %s0, 56
    %v839 = vld [vmem:[%s838] sm:$0xff]
    %v840 = vpack.c.bf16 %v834, %v834
    %841 = vmatpush.bf16.msra.mxu0 %v124
    %842 = vmatpush.bf16.msra.mxu0 %v122
    %843 = vmatpush.bf16.msra.mxu0 %v120
    %844 = vmatpush.bf16.msra.mxu0 %v118
    %845 = vmatpush.bf16.msra.mxu0 %v116
    %846 = vmatpush.bf16.msra.mxu0 %v114
    %847 = vmatpush.bf16.msra.mxu0 %v112
    %848 = vmatpush.bf16.msra.mxu0 %v110
    %849 = vmatmul.bf16.gmra.mxu0 %v840
    %v850 = vpop.f32.mrf.mxu0
    %v851 = vadd.f32 0.0, %v850
    %v852 = vpop.f32.mrf.mxu0
    %853 = vdwg.mxu0
    %854 = vmatpush.bf16.msra.mxu0 %v125
    %855 = vmatpush.bf16.msra.mxu0 %v123
    %856 = vmatpush.bf16.msra.mxu0 %v121
    %857 = vmatpush.bf16.msra.mxu0 %v119
    %858 = vmatpush.bf16.msra.mxu0 %v117
    %859 = vmatpush.bf16.msra.mxu0 %v115
    %860 = vmatpush.bf16.msra.mxu0 %v113
    %861 = vmatpush.bf16.msra.mxu0 %v111
    %862 = vmatmul.bf16.gmra.mxu0 %v840
    %v863 = vpop.f32.mrf.mxu0
    %v864 = vadd.f32 0.0, %v863
    %v865 = vpop.f32.mrf.mxu0
    %866 = vdwg.mxu0
    %v869 = vrot.slane %v864, 4
    %v870 = vsel %vm171, %v851, %v869
    %v872 = vadd.f32 %v839, %v870
    %v873 = vxor.u32 %v872, 2147483648
    %v874 = vmul.f32 %v873, 1.442695
    %v875 = vpow.pop %v874
    %v876 = vadd.f32 %v875, 1.0
    %v877 = vrcp.pop %v876
    %v878 = vmul.f32 %v876, %v877
    %v879 = vsub.f32 1.0, %v878
    %v880 = vmul.f32 %v877, %v879
    %v881 = vadd.f32 %v877, %v880
    %vm882 = vweird.f32 %v876
    %vm883 = vweird.f32 %v877
    %vm884 = vmor %vm882, %vm883
    %v885 = vsel %vm884, %v877, %v881
    %v886 = vand.u32 2147483647, %v876
    %vm887 = vcmp.eq.f32.partialorder %v886, 8.507059e+37
    %v888 = vand.u32 %v876, 2147483648
    %v889 = vor.u32 1.1754944e-38, %v888
    %v890 = vsel %vm887, %v889, %v885
    %v891 = vmul.f32 1.0, %v890
    %v893 = vrot.slane %v872, 4
    %v895 = vxor.u32 %v893, 2147483648
    %v896 = vmul.f32 %v895, 1.442695
    %v897 = vpow.pop %v896
    %v898 = vadd.f32 %v897, 1.0
    %v899 = vrcp.pop %v898
    %v900 = vmul.f32 %v898, %v899
    %v901 = vsub.f32 1.0, %v900
    %v902 = vmul.f32 %v899, %v901
    %v903 = vadd.f32 %v899, %v902
    %vm904 = vweird.f32 %v898
    %vm905 = vweird.f32 %v899
    %vm906 = vmor %vm904, %vm905
    %v907 = vsel %vm906, %v899, %v903
    %v908 = vand.u32 2147483647, %v898
    %vm909 = vcmp.eq.f32.partialorder %v908, 8.507059e+37
    %v910 = vand.u32 %v898, 2147483648
    %v911 = vor.u32 1.1754944e-38, %v910
    %v912 = vsel %vm909, %v911, %v907
    %v913 = vmul.f32 1.0, %v912
    %v914 = vtanh.pop %v893
    %v915 = vsel %vm51, %v913, %v914
    %916 = vrot.lane.b32.xlu0 %v915, 64
    %v917 = vpop.permute.xlu0 %916
    %v918 = vsel %vm51, %v917, %v837
    %v919 = vmul.f32 %v891, %v918
    %920 = vrot.lane.b32.xlu0 %v919, 64
    %v921 = vpop.permute.xlu0 %920
    %v922 = vadd.f32 %v919, %v921
    %v923 = vtanh.pop %v922
    %v924 = vmul.f32 %v915, %v923
    %s925 = scalar_lea.vmem %s1, 28
    %v926 = vld [vmem:[%s925] sm:$0xf]
    %v927 = vmul.f32 %v926, %v924
    %s928 = scalar_lea.vmem [#allocation2], 28
    %929 = vst [vmem:[%s928] sm:$0xf] %v927
    %930 = vst [vmem:[#allocation3] sm:$0xf] %v927
    %v931 = vld [vmem:[#allocation2] sm:$0xf]
    %v932 = vld [vmem:[#allocation2 + $0x4] sm:$0xf]
    %v933 = vld [vmem:[#allocation2 + $0x8] sm:$0xf]
    %v934 = vld [vmem:[#allocation2 + $0xc] sm:$0xf]
    %v935 = vld [vmem:[#allocation2 + $0x10] sm:$0xf]
    %v936 = vld [vmem:[#allocation2 + $0x14] sm:$0xf]
    %v937 = vld [vmem:[#allocation2 + $0x18] sm:$0xf]
    %v938 = vld [vmem:[#allocation2 + $0x1c] sm:$0xf]
    %v939 = vld [vmem:[#allocation3] sm:$0xf]
    %v940 = vld [vmem:[#allocation3 + $0x4] sm:$0xf]
    %v941 = vld [vmem:[#allocation3 + $0x8] sm:$0xf]
    %v942 = vld [vmem:[#allocation3 + $0xc] sm:$0xf]
    %v943 = vld [vmem:[#allocation3 + $0x10] sm:$0xf]
    %v944 = vld [vmem:[#allocation3 + $0x14] sm:$0xf]
    %v945 = vld [vmem:[#allocation3 + $0x18] sm:$0xf]
    %v946 = vld [vmem:[#allocation3 + $0x1c] sm:$0xf]
    %vm947 = vcmp.lt.s32.totalorder %v48, 32
    %v948 = vsel %vm947, 1, 0
    %vm949 = vcmp.eq.s32.totalorder %v948, 1
    %v950 = vsel %vm949, %v931, %v939
    %v951 = vsel %vm949, %v932, %v940
    %v952 = vsel %vm949, %v933, %v941
    %v953 = vsel %vm949, %v934, %v942
    %v954 = vsel %vm949, %v935, %v943
    %v955 = vsel %vm949, %v936, %v944
    %v956 = vsel %vm949, %v937, %v945
    %v957 = vsel %vm949, %v938, %v946
    %966 = vst [vmem:[#allocation1] ss:$2 sm:$0xff] %v950
    %s967 = scalar_lea.vmem [#allocation1], 1
    %968 = vst [vmem:[%s967] ss:$2 sm:$0xff] %v951
    %s969 = scalar_lea.vmem [#allocation1], 16
    %970 = vst [vmem:[%s969] ss:$2 sm:$0xff] %v952
    %s971 = scalar_lea.vmem [#allocation1], 17
    %972 = vst [vmem:[%s971] ss:$2 sm:$0xff] %v953
    %s973 = scalar_lea.vmem [#allocation1], 32
    %974 = vst [vmem:[%s973] ss:$2 sm:$0xff] %v954
    %s975 = scalar_lea.vmem [#allocation1], 33
    %976 = vst [vmem:[%s975] ss:$2 sm:$0xff] %v955
    %s977 = scalar_lea.vmem [#allocation1], 48
    %978 = vst [vmem:[%s977] ss:$2 sm:$0xff] %v956
    %s979 = scalar_lea.vmem [#allocation1], 49
    %980 = vst [vmem:[%s979] ss:$2 sm:$0xff] %v957
    %v981 = vld.sshfl [vmem:[#allocation1] sm:$0xff pattern:$0x75316420]
    %v982 = vld.sshfl [vmem:[#allocation1 + $0x10] sm:$0xff pattern:$0x75316420]
    %v983 = vld.sshfl [vmem:[#allocation1 + $0x20] sm:$0xff pattern:$0x75316420]
    %v984 = vld.sshfl [vmem:[#allocation1 + $0x30] sm:$0xff pattern:$0x75316420]
    %v989 = vpack.c.bf16 %v982, %v981
    %v990 = vpack.c.bf16 %v984, %v983
    %v991 = vld [vmem:[%s5] sm:$0xf]
    %v992 = vld [vmem:[%s5 + $0x4] sm:$0xf]
    %v993 = vld [vmem:[%s5 + $0x8] sm:$0xf]
    %v994 = vld [vmem:[%s5 + $0xc] sm:$0xf]
    %v995 = vld [vmem:[%s5 + $0x10] sm:$0xf]
    %v996 = vld [vmem:[%s5 + $0x14] sm:$0xf]
    %v997 = vld [vmem:[%s5 + $0x18] sm:$0xf]
    %v998 = vld [vmem:[%s5 + $0x1c] sm:$0xf]
    %v999 = vld [vmem:[%s6] sm:$0x1]
    %v1001 = vperm.slane %v999, 0
    %v1011 = vunpack.c.l.b16 %v991
    %v1012 = vunpack.c.l.b16 %v992
    %v1013 = vunpack.c.l.b16 %v993
    %v1014 = vunpack.c.l.b16 %v994
    %v1015 = vunpack.c.l.b16 %v995
    %v1016 = vunpack.c.l.b16 %v996
    %v1017 = vunpack.c.l.b16 %v997
    %v1018 = vunpack.c.l.b16 %v998
    %v1019 = vpack.c.b16 %v1012, %v1011
    %v1020 = vpack.c.b16 %v1014, %v1013
    %v1021 = vpack.c.b16 %v1016, %v1015
    %v1022 = vpack.c.b16 %v1018, %v1017
    %vm1027 = vcmask 523264
    %v1029 = vsel %vm1027, %v989, 0
    %v1032 = vsel %vm1027, %v990, 0
    %1034 = vmatpush.bf16.msra.mxu0 0
    %1035 = vmatpush.bf16.msra.mxu0 0
    %1036 = vmatpush.bf16.msra.mxu0 0
    %1037 = vmatpush.bf16.msra.mxu0 0
    %1038 = vmatpush.bf16.msra.mxu0 %v1022
    %1039 = vmatpush.bf16.msra.mxu0 %v1021
    %1040 = vmatpush.bf16.msra.mxu0 %v1020
    %1041 = vmatpush.bf16.msra.mxu0 %v1019
    %1042 = vmatmul.bf16.gmra.mxu0 %v1029
    %v1043 = vpop.f32.mrf.mxu0
    %v1044 = vadd.f32 %v1001, %v1043
    %v1045 = vpop.f32.mrf.mxu0
    %v1046 = vadd.f32 %v1001, %v1045
    %1047 = vmatmul.bf16.gmra.mxu0 %v1032
    %v1048 = vpop.f32.mrf.mxu0
    %v1049 = vadd.f32 %v1001, %v1048
    %v1050 = vpop.f32.mrf.mxu0
    %v1051 = vadd.f32 %v1001, %v1050
    %1052 = vdwg.mxu0
    %v1053 = vtanh.pop %v1044
    %v1054 = vtanh.pop %v1046
    %v1055 = vtanh.pop %v1049
    %v1056 = vtanh.pop %v1051
    %v1061 = vrot.slane %v1053, 4
    %v1062 = vrot.slane %v1054, 4
    %v1063 = vrot.slane %v1055, 4
    %v1064 = vrot.slane %v1056, 4
    %v1069 = vld [vmem:[%s7] sm:$0x1]
    %v1071 = vperm.slane %v1069, 0
    %v1073 = vmul.f32 %v1053, %v1071
    %v1074 = vmul.f32 %v1061, %v1071
    %v1075 = vmul.f32 %v1054, %v1071
    %v1076 = vmul.f32 %v1062, %v1071
    %v1077 = vmul.f32 %v1055, %v1071
    %v1078 = vmul.f32 %v1063, %v1071
    %v1079 = vmul.f32 %v1056, %v1071
    %v1080 = vmul.f32 %v1064, %v1071
    %vm1081 = vcmask 519168
    %v1082 = vsel %vm1081, %v1073, 0.0
    %1083 = vadd.xlane.f32.xlu0 %v1082
    %v1084 = vpop.xlane.xlu0 %1083
    %v1085 = vsel %vm1081, %v1074, 0.0
    %1086 = vadd.xlane.f32.xlu0 %v1085
    %v1087 = vpop.xlane.xlu0 %1086
    %v1088 = vsel %vm1081, %v1075, 0.0
    %1089 = vadd.xlane.f32.xlu0 %v1088
    %v1090 = vpop.xlane.xlu0 %1089
    %v1091 = vsel %vm1081, %v1076, 0.0
    %1092 = vadd.xlane.f32.xlu0 %v1091
    %v1093 = vpop.xlane.xlu0 %1092
    %v1094 = vsel %vm1081, %v1077, 0.0
    %1095 = vadd.xlane.f32.xlu0 %v1094
    %v1096 = vpop.xlane.xlu0 %1095
    %v1097 = vsel %vm1081, %v1078, 0.0
    %1098 = vadd.xlane.f32.xlu0 %v1097
    %v1099 = vpop.xlane.xlu0 %1098
    %v1100 = vsel %vm1081, %v1079, 0.0
    %1101 = vadd.xlane.f32.xlu0 %v1100
    %v1102 = vpop.xlane.xlu0 %1101
    %v1103 = vsel %vm1081, %v1080, 0.0
    %1104 = vadd.xlane.f32.xlu0 %v1103
    %v1105 = vpop.xlane.xlu0 %1104
    %v1106 = vadd.f32 %v1084, 1e-08
    %v1107 = vadd.f32 %v1087, 1e-08
    %v1108 = vadd.f32 %v1090, 1e-08
    %v1109 = vadd.f32 %v1093, 1e-08
    %v1110 = vadd.f32 %v1096, 1e-08
    %v1111 = vadd.f32 %v1099, 1e-08
    %v1112 = vadd.f32 %v1102, 1e-08
    %v1113 = vadd.f32 %v1105, 1e-08
    %v1114 = vsel %vm171, %v1106, -inf
    %v1115 = vrot.slane %v1114, 4
    %v1116 = vmax.f32 %v1114, %v1115
    %v1117 = vrot.slane %v1116, 2
    %v1118 = vmax.f32 %v1116, %v1117
    %v1119 = vrot.slane %v1118, 1
    %v1120 = vmax.f32 %v1118, %v1119
    %v1121 = vsel %vm171, %v1107, -inf
    %v1122 = vrot.slane %v1121, 4
    %v1123 = vmax.f32 %v1121, %v1122
    %v1124 = vrot.slane %v1123, 2
    %v1125 = vmax.f32 %v1123, %v1124
    %v1126 = vrot.slane %v1125, 1
    %v1127 = vmax.f32 %v1125, %v1126
    %v1128 = vsel %vm171, %v1108, -inf
    %v1129 = vrot.slane %v1128, 4
    %v1130 = vmax.f32 %v1128, %v1129
    %v1131 = vrot.slane %v1130, 2
    %v1132 = vmax.f32 %v1130, %v1131
    %v1133 = vrot.slane %v1132, 1
    %v1134 = vmax.f32 %v1132, %v1133
    %v1135 = vsel %vm171, %v1109, -inf
    %v1136 = vrot.slane %v1135, 4
    %v1137 = vmax.f32 %v1135, %v1136
    %v1138 = vrot.slane %v1137, 2
    %v1139 = vmax.f32 %v1137, %v1138
    %v1140 = vrot.slane %v1139, 1
    %v1141 = vmax.f32 %v1139, %v1140
    %v1142 = vsel %vm171, %v1110, -inf
    %v1143 = vrot.slane %v1142, 4
    %v1144 = vmax.f32 %v1142, %v1143
    %v1145 = vrot.slane %v1144, 2
    %v1146 = vmax.f32 %v1144, %v1145
    %v1147 = vrot.slane %v1146, 1
    %v1148 = vmax.f32 %v1146, %v1147
    %v1149 = vsel %vm171, %v1111, -inf
    %v1150 = vrot.slane %v1149, 4
    %v1151 = vmax.f32 %v1149, %v1150
    %v1152 = vrot.slane %v1151, 2
    %v1153 = vmax.f32 %v1151, %v1152
    %v1154 = vrot.slane %v1153, 1
    %v1155 = vmax.f32 %v1153, %v1154
    %v1156 = vsel %vm171, %v1112, -inf
    %v1157 = vrot.slane %v1156, 4
    %v1158 = vmax.f32 %v1156, %v1157
    %v1159 = vrot.slane %v1158, 2
    %v1160 = vmax.f32 %v1158, %v1159
    %v1161 = vrot.slane %v1160, 1
    %v1162 = vmax.f32 %v1160, %v1161
    %v1163 = vsel %vm171, %v1113, -inf
    %v1164 = vrot.slane %v1163, 4
    %v1165 = vmax.f32 %v1163, %v1164
    %v1166 = vrot.slane %v1165, 2
    %v1167 = vmax.f32 %v1165, %v1166
    %v1168 = vrot.slane %v1167, 1
    %v1169 = vmax.f32 %v1167, %v1168
    %v1170 = vsub.f32 %v1106, %v1120
    %v1171 = vsub.f32 %v1107, %v1127
    %v1172 = vsub.f32 %v1108, %v1134
    %v1173 = vsub.f32 %v1109, %v1141
    %v1174 = vsub.f32 %v1110, %v1148
    %v1175 = vsub.f32 %v1111, %v1155
    %v1176 = vsub.f32 %v1112, %v1162
    %v1177 = vsub.f32 %v1113, %v1169
    %v1178 = vmul.f32 %v1170, 1.442695
    %v1179 = vpow.pop %v1178
    %v1180 = vmul.f32 %v1171, 1.442695
    %v1181 = vpow.pop %v1180
    %v1182 = vmul.f32 %v1172, 1.442695
    %v1183 = vpow.pop %v1182
    %v1184 = vmul.f32 %v1173, 1.442695
    %v1185 = vpow.pop %v1184
    %v1186 = vmul.f32 %v1174, 1.442695
    %v1187 = vpow.pop %v1186
    %v1188 = vmul.f32 %v1175, 1.442695
    %v1189 = vpow.pop %v1188
    %v1190 = vmul.f32 %v1176, 1.442695
    %v1191 = vpow.pop %v1190
    %v1192 = vmul.f32 %v1177, 1.442695
    %v1193 = vpow.pop %v1192
    %v1194 = vsel %vm171, %v1179, 0.0
    %v1195 = vrot.slane %v1194, 4
    %v1196 = vadd.f32 %v1194, %v1195
    %v1197 = vrot.slane %v1196, 2
    %v1198 = vadd.f32 %v1196, %v1197
    %v1199 = vrot.slane %v1198, 1
    %v1200 = vadd.f32 %v1198, %v1199
    %v1201 = vsel %vm171, %v1181, 0.0
    %v1202 = vrot.slane %v1201, 4
    %v1203 = vadd.f32 %v1201, %v1202
    %v1204 = vrot.slane %v1203, 2
    %v1205 = vadd.f32 %v1203, %v1204
    %v1206 = vrot.slane %v1205, 1
    %v1207 = vadd.f32 %v1205, %v1206
    %v1208 = vsel %vm171, %v1183, 0.0
    %v1209 = vrot.slane %v1208, 4
    %v1210 = vadd.f32 %v1208, %v1209
    %v1211 = vrot.slane %v1210, 2
    %v1212 = vadd.f32 %v1210, %v1211
    %v1213 = vrot.slane %v1212, 1
    %v1214 = vadd.f32 %v1212, %v1213
    %v1215 = vsel %vm171, %v1185, 0.0
    %v1216 = vrot.slane %v1215, 4
    %v1217 = vadd.f32 %v1215, %v1216
    %v1218 = vrot.slane %v1217, 2
    %v1219 = vadd.f32 %v1217, %v1218
    %v1220 = vrot.slane %v1219, 1
    %v1221 = vadd.f32 %v1219, %v1220
    %v1222 = vsel %vm171, %v1187, 0.0
    %v1223 = vrot.slane %v1222, 4
    %v1224 = vadd.f32 %v1222, %v1223
    %v1225 = vrot.slane %v1224, 2
    %v1226 = vadd.f32 %v1224, %v1225
    %v1227 = vrot.slane %v1226, 1
    %v1228 = vadd.f32 %v1226, %v1227
    %v1229 = vsel %vm171, %v1189, 0.0
    %v1230 = vrot.slane %v1229, 4
    %v1231 = vadd.f32 %v1229, %v1230
    %v1232 = vrot.slane %v1231, 2
    %v1233 = vadd.f32 %v1231, %v1232
    %v1234 = vrot.slane %v1233, 1
    %v1235 = vadd.f32 %v1233, %v1234
    %v1236 = vsel %vm171, %v1191, 0.0
    %v1237 = vrot.slane %v1236, 4
    %v1238 = vadd.f32 %v1236, %v1237
    %v1239 = vrot.slane %v1238, 2
    %v1240 = vadd.f32 %v1238, %v1239
    %v1241 = vrot.slane %v1240, 1
    %v1242 = vadd.f32 %v1240, %v1241
    %v1243 = vsel %vm171, %v1193, 0.0
    %v1244 = vrot.slane %v1243, 4
    %v1245 = vadd.f32 %v1243, %v1244
    %v1246 = vrot.slane %v1245, 2
    %v1247 = vadd.f32 %v1245, %v1246
    %v1248 = vrot.slane %v1247, 1
    %v1249 = vadd.f32 %v1247, %v1248
    %v1250 = vrcp.pop %v1200
    %v1251 = vmul.f32 %v1200, %v1250
    %v1252 = vsub.f32 1.0, %v1251
    %v1253 = vmul.f32 %v1250, %v1252
    %v1254 = vadd.f32 %v1250, %v1253
    %vm1255 = vweird.f32 %v1200
    %vm1256 = vweird.f32 %v1250
    %vm1257 = vmor %vm1255, %vm1256
    %v1258 = vsel %vm1257, %v1250, %v1254
    %v1259 = vand.u32 2147483647, %v1200
    %vm1260 = vcmp.eq.f32.partialorder %v1259, 8.507059e+37
    %v1261 = vand.u32 %v1200, 2147483648
    %v1262 = vor.u32 1.1754944e-38, %v1261
    %v1263 = vsel %vm1260, %v1262, %v1258
    %v1264 = vrcp.pop %v1207
    %v1265 = vmul.f32 %v1207, %v1264
    %v1266 = vsub.f32 1.0, %v1265
    %v1267 = vmul.f32 %v1264, %v1266
    %v1268 = vadd.f32 %v1264, %v1267
    %vm1269 = vweird.f32 %v1207
    %vm1270 = vweird.f32 %v1264
    %vm1271 = vmor %vm1269, %vm1270
    %v1272 = vsel %vm1271, %v1264, %v1268
    %v1273 = vand.u32 2147483647, %v1207
    %vm1274 = vcmp.eq.f32.partialorder %v1273, 8.507059e+37
    %v1275 = vand.u32 %v1207, 2147483648
    %v1276 = vor.u32 1.1754944e-38, %v1275
    %v1277 = vsel %vm1274, %v1276, %v1272
    %v1278 = vrcp.pop %v1214
    %v1279 = vmul.f32 %v1214, %v1278
    %v1280 = vsub.f32 1.0, %v1279
    %v1281 = vmul.f32 %v1278, %v1280
    %v1282 = vadd.f32 %v1278, %v1281
    %vm1283 = vweird.f32 %v1214
    %vm1284 = vweird.f32 %v1278
    %vm1285 = vmor %vm1283, %vm1284
    %v1286 = vsel %vm1285, %v1278, %v1282
    %v1287 = vand.u32 2147483647, %v1214
    %vm1288 = vcmp.eq.f32.partialorder %v1287, 8.507059e+37
    %v1289 = vand.u32 %v1214, 2147483648
    %v1290 = vor.u32 1.1754944e-38, %v1289
    %v1291 = vsel %vm1288, %v1290, %v1286
    %v1292 = vrcp.pop %v1221
    %v1293 = vmul.f32 %v1221, %v1292
    %v1294 = vsub.f32 1.0, %v1293
    %v1295 = vmul.f32 %v1292, %v1294
    %v1296 = vadd.f32 %v1292, %v1295
    %vm1297 = vweird.f32 %v1221
    %vm1298 = vweird.f32 %v1292
    %vm1299 = vmor %vm1297, %vm1298
    %v1300 = vsel %vm1299, %v1292, %v1296
    %v1301 = vand.u32 2147483647, %v1221
    %vm1302 = vcmp.eq.f32.partialorder %v1301, 8.507059e+37
    %v1303 = vand.u32 %v1221, 2147483648
    %v1304 = vor.u32 1.1754944e-38, %v1303
    %v1305 = vsel %vm1302, %v1304, %v1300
    %v1306 = vrcp.pop %v1228
    %v1307 = vmul.f32 %v1228, %v1306
    %v1308 = vsub.f32 1.0, %v1307
    %v1309 = vmul.f32 %v1306, %v1308
    %v1310 = vadd.f32 %v1306, %v1309
    %vm1311 = vweird.f32 %v1228
    %vm1312 = vweird.f32 %v1306
    %vm1313 = vmor %vm1311, %vm1312
    %v1314 = vsel %vm1313, %v1306, %v1310
    %v1315 = vand.u32 2147483647, %v1228
    %vm1316 = vcmp.eq.f32.partialorder %v1315, 8.507059e+37
    %v1317 = vand.u32 %v1228, 2147483648
    %v1318 = vor.u32 1.1754944e-38, %v1317
    %v1319 = vsel %vm1316, %v1318, %v1314
    %v1320 = vrcp.pop %v1235
    %v1321 = vmul.f32 %v1235, %v1320
    %v1322 = vsub.f32 1.0, %v1321
    %v1323 = vmul.f32 %v1320, %v1322
    %v1324 = vadd.f32 %v1320, %v1323
    %vm1325 = vweird.f32 %v1235
    %vm1326 = vweird.f32 %v1320
    %vm1327 = vmor %vm1325, %vm1326
    %v1328 = vsel %vm1327, %v1320, %v1324
    %v1329 = vand.u32 2147483647, %v1235
    %vm1330 = vcmp.eq.f32.partialorder %v1329, 8.507059e+37
    %v1331 = vand.u32 %v1235, 2147483648
    %v1332 = vor.u32 1.1754944e-38, %v1331
    %v1333 = vsel %vm1330, %v1332, %v1328
    %v1334 = vrcp.pop %v1242
    %v1335 = vmul.f32 %v1242, %v1334
    %v1336 = vsub.f32 1.0, %v1335
    %v1337 = vmul.f32 %v1334, %v1336
    %v1338 = vadd.f32 %v1334, %v1337
    %vm1339 = vweird.f32 %v1242
    %vm1340 = vweird.f32 %v1334
    %vm1341 = vmor %vm1339, %vm1340
    %v1342 = vsel %vm1341, %v1334, %v1338
    %v1343 = vand.u32 2147483647, %v1242
    %vm1344 = vcmp.eq.f32.partialorder %v1343, 8.507059e+37
    %v1345 = vand.u32 %v1242, 2147483648
    %v1346 = vor.u32 1.1754944e-38, %v1345
    %v1347 = vsel %vm1344, %v1346, %v1342
    %v1348 = vrcp.pop %v1249
    %v1349 = vmul.f32 %v1249, %v1348
    %v1350 = vsub.f32 1.0, %v1349
    %v1351 = vmul.f32 %v1348, %v1350
    %v1352 = vadd.f32 %v1348, %v1351
    %vm1353 = vweird.f32 %v1249
    %vm1354 = vweird.f32 %v1348
    %vm1355 = vmor %vm1353, %vm1354
    %v1356 = vsel %vm1355, %v1348, %v1352
    %v1357 = vand.u32 2147483647, %v1249
    %vm1358 = vcmp.eq.f32.partialorder %v1357, 8.507059e+37
    %v1359 = vand.u32 %v1249, 2147483648
    %v1360 = vor.u32 1.1754944e-38, %v1359
    %v1361 = vsel %vm1358, %v1360, %v1356
    %v1362 = vmul.f32 %v1179, %v1263
    %v1363 = vmul.f32 %v1181, %v1277
    %v1364 = vmul.f32 %v1183, %v1291
    %v1365 = vmul.f32 %v1185, %v1305
    %v1366 = vmul.f32 %v1187, %v1319
    %v1367 = vmul.f32 %v1189, %v1333
    %v1368 = vmul.f32 %v1191, %v1347
    %v1369 = vmul.f32 %v1193, %v1361
    %v1370 = vadd.f32 %v1362, 1e-08
    %v1371 = vadd.f32 %v1363, 1e-08
    %v1372 = vadd.f32 %v1364, 1e-08
    %v1373 = vadd.f32 %v1365, 1e-08
    %v1374 = vadd.f32 %v1366, 1e-08
    %v1375 = vadd.f32 %v1367, 1e-08
    %v1376 = vadd.f32 %v1368, 1e-08
    %v1377 = vadd.f32 %v1369, 1e-08
    %v1378 = vmul.f32 %v1370, %v950
    %v1379 = vmul.f32 %v1371, %v951
    %v1380 = vmul.f32 %v1372, %v952
    %v1381 = vmul.f32 %v1373, %v953
    %v1382 = vmul.f32 %v1374, %v954
    %v1383 = vmul.f32 %v1375, %v955
    %v1384 = vmul.f32 %v1376, %v956
    %v1385 = vmul.f32 %v1377, %v957
    %v1386 = vsel %vm1081, %v1378, 0.0
    %v1387 = vsel %vm1081, %v1379, 0.0
    %v1388 = vadd.f32 %v1386, %v1387
    %v1389 = vsel %vm1081, %v1380, 0.0
    %v1390 = vadd.f32 %v1388, %v1389
    %v1391 = vsel %vm1081, %v1381, 0.0
    %v1392 = vadd.f32 %v1390, %v1391
    %v1393 = vsel %vm1081, %v1382, 0.0
    %v1394 = vadd.f32 %v1392, %v1393
    %v1395 = vsel %vm1081, %v1383, 0.0
    %v1396 = vadd.f32 %v1394, %v1395
    %v1397 = vsel %vm1081, %v1384, 0.0
    %v1398 = vadd.f32 %v1396, %v1397
    %v1399 = vsel %vm1081, %v1385, 0.0
    %v1400 = vadd.f32 %v1398, %v1399
    %1401 = vst.msk [vmem:[#allocation4] sm:$0xf] %vm1081, %v1400
    // Predicated region
    $region34: #{word_to_sent_forward.1} parent=1 // pred_check
      _
    $region35: #{word_to_sent_forward.1} parent=1 // pred_check_branch
      %1403 = sbr.rel (0) target = $region37
    $region36: #{word_to_sent_forward.1} parent=1 // pred_region
      %1405 = vsyncadd [#allocation5], 0
      %s1407 = sshll.u32 [#allocation4], 4
      %s1408 = int_to_ptr.vmem [resolvable:$true] %s1407
      %s1409 = sshll.u32 %s8, 4
      %s1410 = int_to_ptr.hbm [resolvable:$true] %s1409
      %1412 = dma.vmem_to_hbm [thread:$0]  %s1408, 64, %s1410, [#allocation5]
    $region37: #{word_to_sent_forward.1} parent=1 // pred_fallthru
      _
    // Predicated region
    $region38: #{word_to_sent_forward.1} parent=1 // pred_check
      _
    $region39: #{word_to_sent_forward.1} parent=1 // pred_check_branch
      %1414 = sbr.rel (0) target = $region41
    $region40: #{word_to_sent_forward.1} parent=1 // pred_region
      %1416 = dma.done [#allocation5], 64
    $region41: #{word_to_sent_forward.1} parent=1 // pred_fallthru
      _
    %1417 = vsyncpa [#allocation5], 1

</llo_original>
